<compile_context>
chip_gen: v6e
topology: v6e:2x2x1
jax: 0.10.0
libtpu: 0.0.40
codegen_flags: <defaults>
</compile_context>

<pallas_src>
import numpy as np
import jax
import jax.numpy as jnp
from jax.experimental import pallas as pl
from jax.experimental.pallas import tpu as pltpu

EPS = 1e-5


# ---------------------------------------------------------------------------
# Bilinear interpolation helpers (PyTorch align_corners=False convention)
# ---------------------------------------------------------------------------
def _bilinear_taps(out_size, in_size):
    """For each output index: the two source taps and the blend weight."""
    scale = in_size / out_size
    i = np.arange(out_size)
    src = (i + 0.5) * scale - 0.5
    src = np.maximum(src, 0.0)
    i0 = np.minimum(np.floor(src).astype(np.int64), in_size - 1)
    i1 = np.minimum(i0 + 1, in_size - 1)
    lam = (src - i0).astype(np.float32)
    return i0.astype(np.int32), i1.astype(np.int32), lam


def _bilinear_matrix(out_size, in_size):
    i0, i1, lam = _bilinear_taps(out_size, in_size)
    mat = np.zeros((out_size, in_size), dtype=np.float32)
    mat[np.arange(out_size), i0] += (1.0 - lam)
    mat[np.arange(out_size), i1] += lam
    return mat


def _largest_divisor_leq(n, target):
    t = min(target, n)
    while n % t:
        t -= 1
    return t


# ---------------------------------------------------------------------------
# Kernel A: bilinear upsample + conv1 (K=256) + BN partial statistics
# ---------------------------------------------------------------------------
def _make_upsample_stats_kernel(H, W, h, w, C, TH):
    def kernel(i0_ref, lam_ref, mx_ref, high_ref, low_ref, w1_ref,
               hi_ref, stats_ref, colbuf):
        # high_ref: (h, w, C) f32  (full low-res block for this batch, resident)
        # low_ref : (TH, W, C) f32 ; hi_ref: (TH, W, C) bf16 ; stats_ref: (2, C) f32
        r0 = pl.program_id(1) * TH

        # ---- height axis: static 2-tap lerp per output row (taps from SMEM).
        for ii in range(TH):
            i = r0 + ii
            i0v = i0_ref[i]
            i1v = jnp.minimum(i0v + 1, h - 1)
            mu = lam_ref[i]
            row = (1.0 - mu) * high_ref[i0v] + mu * high_ref[i1v]   # (w, C) f32
            colbuf[:, ii * C:(ii + 1) * C] = row                    # 128-aligned lane slab

        # ---- width axis: one MXU matmul for the whole row-group (kept f32 so the
        # residual `hi` path only sees the final bf16 store quantization).
        a = jnp.dot(mx_ref[...], colbuf[...],
                    preferred_element_type=jnp.float32)             # (W, TH*C)

        # store each output row as a dense (W, C) slab directly into hi_ref (bf16).
        for ii in range(TH):
            hi_ref[ii] = a[:, ii * C:(ii + 1) * C].astype(jnp.bfloat16)

        # ---- conv1 on the freshly staged tile, fused K=256 bf16 matmul.
        # (v5e note: two K=128 matmuls fill its 128-deep MXU equally well.)
        hi_bf = hi_ref[...].reshape(TH * W, C)                       # bf16 (readback, no copy buffer)
        low_bf = low_ref[...].reshape(TH * W, C).astype(jnp.bfloat16)
        x = jnp.concatenate([hi_bf, low_bf], axis=-1)                # (TH*W, 256) bf16
        y1 = jnp.dot(x, w1_ref[...], preferred_element_type=jnp.float32)  # (TH*W, C) f32
        # conv1 bias intentionally omitted: bias followed by BatchNorm cancels exactly.

        # ---- BN partial statistics for this tile (combined in XLA between calls).
        stats_ref[...] = jnp.concatenate(
            [jnp.sum(y1, axis=0, keepdims=True),
             jnp.sum(y1 * y1, axis=0, keepdims=True)], axis=0)       # (2, C)

    return kernel


# ---------------------------------------------------------------------------
# Kernel C: conv1 recompute + BN apply + ReLU + conv2 + sigmoid + fuse
# ---------------------------------------------------------------------------
def _make_apply_kernel(C):
    def kernel(hi_ref, low_ref, w1_ref, scale_ref, shift_ref, w2_ref, b2_ref,
               out_ref):
        hi = hi_ref[...]                                             # (TR, C) bf16
        low = low_ref[...]                                           # (TR, C) f32
        x = jnp.concatenate([hi, low.astype(jnp.bfloat16)], axis=-1)
        y1 = jnp.dot(x, w1_ref[...], preferred_element_type=jnp.float32)
        yr = jnp.maximum(y1 * scale_ref[...] + shift_ref[...], 0.0)  # BN + ReLU
        # conv2(128->1) with a column-replicated weight: the logit is produced
        # lane-broadcast by the MXU, so sigmoid runs lane-dense and `att * low`
        # needs no cross-lane broadcast.
        logit = jnp.dot(yr.astype(jnp.bfloat16), w2_ref[...],
                        preferred_element_type=jnp.float32) + b2_ref[...]
        att = jax.nn.sigmoid(logit)                                  # (TR, C), all lanes equal
        out_ref[...] = att * low + hi.astype(jnp.float32)

    return kernel


# ---------------------------------------------------------------------------
# Parameters (PyTorch module: Conv2d(256,128,1) -> BN(128) -> ReLU -> Conv2d(128,1,1))
# ---------------------------------------------------------------------------
def init_params(key):
    ks = jax.random.split(key, 6)
    return dict(
        W1=0.05 * jax.random.normal(ks[0], (128, 256), jnp.float32),
        b1=0.05 * jax.random.normal(ks[1], (128,), jnp.float32),
        gamma=1.0 + 0.1 * jax.random.normal(ks[2], (128,), jnp.float32),
        beta=0.1 * jax.random.normal(ks[3], (128,), jnp.float32),
        W2=0.05 * jax.random.normal(ks[4], (1, 128), jnp.float32),
        b2=0.05 * jax.random.normal(ks[5], (1,), jnp.float32),
    )


# ---------------------------------------------------------------------------
# Wrapper.  Accepts NCHW (PyTorch convention); the kernels are channels-last.
# ---------------------------------------------------------------------------
def fusion_forward(low_nchw, high_nchw, params):
    B, C, H, W = low_nchw.shape
    _, Ch, h, w = high_nchw.shape
    assert C == 128 and Ch == 128, "module fixes channels at 128 (Conv2d(256,128,1))"

    TH = _largest_divisor_leq(H, 8)          # output rows per tile in kernel A
    R = H // TH
    M = B * H * W
    TR = _largest_divisor_leq(M, 512)        # pixel rows per tile in kernel C

    # channels-last activations (see TODO about producer-side layout).
    low_nhwc = jnp.transpose(low_nchw, (0, 2, 3, 1))       # (B, H, W, C)
    high_nhwc = jnp.transpose(high_nchw, (0, 2, 3, 1))     # (B, h, w, C)

    i0_np, _, lam_np = _bilinear_taps(H, h)
    i0_tab = jnp.asarray(i0_np)                            # (H,) int32, SMEM
    lam_tab = jnp.asarray(lam_np)                          # (H,) f32,  SMEM
    mx = jnp.asarray(_bilinear_matrix(W, w))               # (W, w) f32 width-interp matrix

    W1 = params["W1"]                                      # (128, 256)
    # cat([high, low], dim=1): rows 0..127 of W1c hit `high`, rows 128..255 hit `low`.
    w1c = jnp.asarray(W1.T, dtype=jnp.bfloat16)            # (256, 128)

    smem = pl.BlockSpec(memory_space=pltpu.MemorySpace.SMEM)

    # ---- pass 1: upsample + conv1 + per-tile BN partial sums ---------------
    kernel_a = _make_upsample_stats_kernel(H, W, h, w, C, TH)
    hi4, pstats = pl.pallas_call(
        kernel_a,
        out_shape=(jax.ShapeDtypeStruct((B, H, W, C), jnp.bfloat16),
                   jax.ShapeDtypeStruct((B, R, 2, C), jnp.float32)),
        grid=(B, R),
        in_specs=[
            smem,                                                     # i0_tab
            smem,                                                     # lam_tab
            pl.BlockSpec((W, w), lambda b, r: (0, 0)),                # mx (resident)
            pl.BlockSpec((None, h, w, C), lambda b, r: (b, 0, 0, 0)), # high (per batch)
            pl.BlockSpec((None, TH, W, C), lambda b, r: (b, r, 0, 0)),# low tile
            pl.BlockSpec((256, C), lambda b, r: (0, 0)),              # W1 (resident)
        ],
        out_specs=(
            pl.BlockSpec((None, TH, W, C), lambda b, r: (b, r, 0, 0)),    # hi tile
            pl.BlockSpec((None, None, 2, C), lambda b, r: (b, r, 0, 0)),  # partial stats
        ),
        scratch_shapes=[pltpu.VMEM((w, TH * C), jnp.float32)],
        compiler_params=pltpu.CompilerParams(
            dimension_semantics=("parallel", "parallel"),
            # generation note: keep scoped VMEM conservative so it also fits v7x's
            # 64 MiB physical VMEM; v5e/v6e can raise this for larger tiles.
            vmem_limit_bytes=32 * 1024 * 1024),
    )(i0_tab, lam_tab, mx, high_nhwc, low_nhwc, w1c)

    # ---- finalize BatchNorm batch statistics (tiny XLA ops between the calls)
    s = jnp.sum(pstats, axis=(0, 1))                       # (2, C)
    cnt = jnp.float32(B * H * W)
    mean = s[0] / cnt
    var = jnp.maximum(s[1] / cnt - mean * mean, 0.0)       # biased variance
    inv = jax.lax.rsqrt(var + EPS)
    scale = (params["gamma"] * inv).reshape(1, C)
    shift = (params["beta"] - mean * params["gamma"] * inv).reshape(1, C)

    w2rep = jnp.broadcast_to(params["W2"].reshape(C, 1), (C, C)).astype(jnp.bfloat16)
    b2rep = jnp.broadcast_to(params["b2"].reshape(1, 1), (1, C)).astype(jnp.float32)

    hi2 = hi4.reshape(M, C)          # contiguous, free reshape
    low2 = low_nhwc.reshape(M, C)

    # ---- pass 2: BN apply + ReLU + conv2 + sigmoid + residual fuse ---------
    kernel_c = _make_apply_kernel(C)
    out2 = pl.pallas_call(
        kernel_c,
        out_shape=jax.ShapeDtypeStruct((M, C), jnp.float32),
        grid=(M // TR,),
        in_specs=[
            pl.BlockSpec((TR, C), lambda t: (t, 0)),       # hi tile (bf16)
            pl.BlockSpec((TR, C), lambda t: (t, 0)),       # low tile (f32)
            pl.BlockSpec((256, C), lambda t: (0, 0)),      # W1 (resident)
            pl.BlockSpec((1, C), lambda t: (0, 0)),        # BN scale
            pl.BlockSpec((1, C), lambda t: (0, 0)),        # BN shift
            pl.BlockSpec((C, C), lambda t: (0, 0)),        # W2 column-replicated
            pl.BlockSpec((1, C), lambda t: (0, 0)),        # b2 replicated
        ],
        out_specs=pl.BlockSpec((TR, C), lambda t: (t, 0)),
        compiler_params=pltpu.CompilerParams(
            dimension_semantics=("parallel",),
            vmem_limit_bytes=32 * 1024 * 1024),
    )(hi2, low2, w1c, scale, shift, w2rep, b2rep)

    return jnp.transpose(out2.reshape(B, H, W, C), (0, 3, 1, 2))


# ---------------------------------------------------------------------------
# Pure-JAX f32 reference (NCHW) for correctness checking
# ---------------------------------------------------------------------------
def fusion_ref(low, high, params):
    B, C, H, W = low.shape
    _, _, h, w = high.shape
    My = jnp.asarray(_bilinear_matrix(H, h))
    Mx = jnp.asarray(_bilinear_matrix(W, w))
    hi = jnp.einsum('Hh,bchw->bcHw', My, high)
    hi = jnp.einsum('Ww,bchw->bchW', Mx, hi)
    x = jnp.concatenate([hi, low], axis=1)                                 # (B,256,H,W)
    y1 = jnp.einsum('oc,bchw->bohw', params["W1"], x) + params["b1"][None, :, None, None]
    mean = y1.mean(axis=(0, 2, 3), keepdims=True)
    var = ((y1 - mean) ** 2).mean(axis=(0, 2, 3), keepdims=True)
    ybn = (y1 - mean) * jax.lax.rsqrt(var + EPS)
    ybn = ybn * params["gamma"][None, :, None, None] + params["beta"][None, :, None, None]
    yr = jnp.maximum(ybn, 0.0)
    logit = jnp.einsum('oc,bchw->bohw', params["W2"], yr) + params["b2"][None, :, None, None]
    att = jax.nn.sigmoid(logit)
    return att * low + hi


if __name__ == "__main__":
    key = jax.random.PRNGKey(0)
    k_low, k_high, k_par = jax.random.split(key, 3)

    # small shapes consistent with the module (channels fixed at 128 by Conv2d(256,128,1))
    B, C, H, W = 2, 128, 8, 8     # `low`
    h, w = 4, 4                   # `high` (upsampled to 8x8 inside forward)

    low = jax.random.normal(k_low, (B, C, H, W), jnp.float32)
    high = jax.random.normal(k_high, (B, C, h, w), jnp.float32)
    params = init_params(k_par)

    out = fusion_forward(low, high, params)
    out = jax.block_until_ready(out)
    assert out.shape == (B, C, H, W)

    ref = fusion_ref(low, high, params)
    # conv1/conv2 operands and the staged `hi` are bf16 on the MXU (f32 accumulation);
    # the tolerance reflects that quantization, not a structural mismatch.
    np.testing.assert_allclose(np.asarray(out), np.asarray(ref), rtol=2e-2, atol=2e-2)

    print("KERNEL_OK")
</pallas_src>

<mosaic_0001>
module attributes {stable_mosaic.version = 11 : i64} {
  func.func @kernel(%arg0: i32, %arg1: i32, %arg2: memref<8xi32, #tpu.memory_space<smem>>, %arg3: memref<8xf32, #tpu.memory_space<smem>>, %arg4: memref<8x4xf32, #tpu.memory_space<vmem>>, %arg5: memref<1x4x4x128xf32, #tpu.memory_space<vmem>>, %arg6: memref<1x8x8x128xf32, #tpu.memory_space<vmem>>, %arg7: memref<256x128xbf16, #tpu.memory_space<vmem>>, %arg8: memref<1x8x8x128xbf16, #tpu.memory_space<vmem>>, %arg9: memref<1x1x2x128xf32, #tpu.memory_space<vmem>>, %arg10: memref<4x1024xf32, #tpu.memory_space<vmem>>) attributes {dimension_semantics = [#tpu.dimension_semantics<parallel>, #tpu.dimension_semantics<parallel>], iteration_bounds = array<i64: 2, 1>, scalar_prefetch = 0 : i64, scratch_operands = 1 : i64, tpu.core_type = #tpu.core_type<tc>, window_params = [{transform_indices = @transform_0, window_bounds = array<i64: 8>}, {transform_indices = @transform_1, window_bounds = array<i64: 8>}, {pipeline_mode = #tpu.pipeline_mode<synchronous>, transform_indices = @transform_2, window_bounds = array<i64: 8, 4>}, {transform_indices = @transform_3, window_bounds = array<i64: 1, 4, 4, 128>}, {transform_indices = @transform_4, window_bounds = array<i64: 1, 8, 8, 128>}, {pipeline_mode = #tpu.pipeline_mode<synchronous>, transform_indices = @transform_5, window_bounds = array<i64: 256, 128>}, {transform_indices = @transform_6, window_bounds = array<i64: 1, 8, 8, 128>}, {transform_indices = @transform_7, window_bounds = array<i64: 1, 1, 2, 128>}]} {
    %c8_i32 = arith.constant 8 : i32
    %0 = arith.muli %arg1, %c8_i32 : i32
    %c0_i32 = arith.constant 0 : i32
    %1 = arith.addi %0, %c0_i32 : i32
    %2 = arith.index_cast %1 : i32 to index
    %3 = memref.load %arg2[%2] : memref<8xi32, #tpu.memory_space<smem>>
    %c1_i32 = arith.constant 1 : i32
    %4 = arith.addi %3, %c1_i32 : i32
    %c3_i32 = arith.constant 3 : i32
    %5 = arith.minsi %4, %c3_i32 : i32
    %6 = arith.index_cast %1 : i32 to index
    %7 = memref.load %arg3[%6] : memref<8xf32, #tpu.memory_space<smem>>
    %cst = arith.constant 1.000000e+00 : f32
    %8 = arith.subf %cst, %7 : f32
    %c0 = arith.constant 0 : index
    %9 = arith.index_cast %3 : i32 to index
    %c0_0 = arith.constant 0 : index
    %c0_1 = arith.constant 0 : index
    %10 = vector.load %arg5[%c0, %9, %c0_0, %c0_1] : memref<1x4x4x128xf32, #tpu.memory_space<vmem>>, vector<1x1x4x128xf32>
    %11 = vector.shape_cast %10 : vector<1x1x4x128xf32> to vector<4x128xf32>
    %12 = vector.broadcast %8 : f32 to vector<4x128xf32>
    %13 = arith.mulf %12, %11 : vector<4x128xf32>
    %c0_2 = arith.constant 0 : index
    %14 = arith.index_cast %5 : i32 to index
    %c0_3 = arith.constant 0 : index
    %c0_4 = arith.constant 0 : index
    %15 = vector.load %arg5[%c0_2, %14, %c0_3, %c0_4] : memref<1x4x4x128xf32, #tpu.memory_space<vmem>>, vector<1x1x4x128xf32>
    %16 = vector.shape_cast %15 : vector<1x1x4x128xf32> to vector<4x128xf32>
    %17 = vector.broadcast %7 : f32 to vector<4x128xf32>
    %18 = arith.mulf %17, %16 : vector<4x128xf32>
    %19 = arith.addf %13, %18 : vector<4x128xf32>
    %c0_5 = arith.constant 0 : index
    %c0_6 = arith.constant 0 : index
    %20 = vector.load %arg10[%c0_5, %c0_6] : memref<4x1024xf32, #tpu.memory_space<vmem>>, vector<4x128xf32>
    tpu.vector_store %arg10[%c0_5, %c0_6], %19 {strides = array<i32>} : memref<4x1024xf32, #tpu.memory_space<vmem>>, vector<4x128xf32>,
    %c1_i32_7 = arith.constant 1 : i32
    %21 = arith.addi %0, %c1_i32_7 : i32
    %22 = arith.index_cast %21 : i32 to index
    %23 = memref.load %arg2[%22] : memref<8xi32, #tpu.memory_space<smem>>
    %c1_i32_8 = arith.constant 1 : i32
    %24 = arith.addi %23, %c1_i32_8 : i32
    %c3_i32_9 = arith.constant 3 : i32
    %25 = arith.minsi %24, %c3_i32_9 : i32
    %26 = arith.index_cast %21 : i32 to index
    %27 = memref.load %arg3[%26] : memref<8xf32, #tpu.memory_space<smem>>
    %cst_10 = arith.constant 1.000000e+00 : f32
    %28 = arith.subf %cst_10, %27 : f32
    %c0_11 = arith.constant 0 : index
    %29 = arith.index_cast %23 : i32 to index
    %c0_12 = arith.constant 0 : index
    %c0_13 = arith.constant 0 : index
    %30 = vector.load %arg5[%c0_11, %29, %c0_12, %c0_13] : memref<1x4x4x128xf32, #tpu.memory_space<vmem>>, vector<1x1x4x128xf32>
    %31 = vector.shape_cast %30 : vector<1x1x4x128xf32> to vector<4x128xf32>
    %32 = vector.broadcast %28 : f32 to vector<4x128xf32>
    %33 = arith.mulf %32, %31 : vector<4x128xf32>
    %c0_14 = arith.constant 0 : index
    %34 = arith.index_cast %25 : i32 to index
    %c0_15 = arith.constant 0 : index
    %c0_16 = arith.constant 0 : index
    %35 = vector.load %arg5[%c0_14, %34, %c0_15, %c0_16] : memref<1x4x4x128xf32, #tpu.memory_space<vmem>>, vector<1x1x4x128xf32>
    %36 = vector.shape_cast %35 : vector<1x1x4x128xf32> to vector<4x128xf32>
    %37 = vector.broadcast %27 : f32 to vector<4x128xf32>
    %38 = arith.mulf %37, %36 : vector<4x128xf32>
    %39 = arith.addf %33, %38 : vector<4x128xf32>
    %c0_17 = arith.constant 0 : index
    %c128 = arith.constant 128 : index
    %40 = vector.load %arg10[%c0_17, %c128] : memref<4x1024xf32, #tpu.memory_space<vmem>>, vector<4x128xf32>
    tpu.vector_store %arg10[%c0_17, %c128], %39 {strides = array<i32>} : memref<4x1024xf32, #tpu.memory_space<vmem>>, vector<4x128xf32>,
    %c2_i32 = arith.constant 2 : i32
    %41 = arith.addi %0, %c2_i32 : i32
    %42 = arith.index_cast %41 : i32 to index
    %43 = memref.load %arg2[%42] : memref<8xi32, #tpu.memory_space<smem>>
    %c1_i32_18 = arith.constant 1 : i32
    %44 = arith.addi %43, %c1_i32_18 : i32
    %c3_i32_19 = arith.constant 3 : i32
    %45 = arith.minsi %44, %c3_i32_19 : i32
    %46 = arith.index_cast %41 : i32 to index
    %47 = memref.load %arg3[%46] : memref<8xf32, #tpu.memory_space<smem>>
    %cst_20 = arith.constant 1.000000e+00 : f32
    %48 = arith.subf %cst_20, %47 : f32
    %c0_21 = arith.constant 0 : index
    %49 = arith.index_cast %43 : i32 to index
    %c0_22 = arith.constant 0 : index
    %c0_23 = arith.constant 0 : index
    %50 = vector.load %arg5[%c0_21, %49, %c0_22, %c0_23] : memref<1x4x4x128xf32, #tpu.memory_space<vmem>>, vector<1x1x4x128xf32>
    %51 = vector.shape_cast %50 : vector<1x1x4x128xf32> to vector<4x128xf32>
    %52 = vector.broadcast %48 : f32 to vector<4x128xf32>
    %53 = arith.mulf %52, %51 : vector<4x128xf32>
    %c0_24 = arith.constant 0 : index
    %54 = arith.index_cast %45 : i32 to index
    %c0_25 = arith.constant 0 : index
    %c0_26 = arith.constant 0 : index
    %55 = vector.load %arg5[%c0_24, %54, %c0_25, %c0_26] : memref<1x4x4x128xf32, #tpu.memory_space<vmem>>, vector<1x1x4x128xf32>
    %56 = vector.shape_cast %55 : vector<1x1x4x128xf32> to vector<4x128xf32>
    %57 = vector.broadcast %47 : f32 to vector<4x128xf32>
    %58 = arith.mulf %57, %56 : vector<4x128xf32>
    %59 = arith.addf %53, %58 : vector<4x128xf32>
    %c0_27 = arith.constant 0 : index
    %c256 = arith.constant 256 : index
    %60 = vector.load %arg10[%c0_27, %c256] : memref<4x1024xf32, #tpu.memory_space<vmem>>, vector<4x128xf32>
    tpu.vector_store %arg10[%c0_27, %c256], %59 {strides = array<i32>} : memref<4x1024xf32, #tpu.memory_space<vmem>>, vector<4x128xf32>,
    %c3_i32_28 = arith.constant 3 : i32
    %61 = arith.addi %0, %c3_i32_28 : i32
    %62 = arith.index_cast %61 : i32 to index
    %63 = memref.load %arg2[%62] : memref<8xi32, #tpu.memory_space<smem>>
    %c1_i32_29 = arith.constant 1 : i32
    %64 = arith.addi %63, %c1_i32_29 : i32
    %c3_i32_30 = arith.constant 3 : i32
    %65 = arith.minsi %64, %c3_i32_30 : i32
    %66 = arith.index_cast %61 : i32 to index
    %67 = memref.load %arg3[%66] : memref<8xf32, #tpu.memory_space<smem>>
    %cst_31 = arith.constant 1.000000e+00 : f32
    %68 = arith.subf %cst_31, %67 : f32
    %c0_32 = arith.constant 0 : index
    %69 = arith.index_cast %63 : i32 to index
    %c0_33 = arith.constant 0 : index
    %c0_34 = arith.constant 0 : index
    %70 = vector.load %arg5[%c0_32, %69, %c0_33, %c0_34] : memref<1x4x4x128xf32, #tpu.memory_space<vmem>>, vector<1x1x4x128xf32>
    %71 = vector.shape_cast %70 : vector<1x1x4x128xf32> to vector<4x128xf32>
    %72 = vector.broadcast %68 : f32 to vector<4x128xf32>
    %73 = arith.mulf %72, %71 : vector<4x128xf32>
    %c0_35 = arith.constant 0 : index
    %74 = arith.index_cast %65 : i32 to index
    %c0_36 = arith.constant 0 : index
    %c0_37 = arith.constant 0 : index
    %75 = vector.load %arg5[%c0_35, %74, %c0_36, %c0_37] : memref<1x4x4x128xf32, #tpu.memory_space<vmem>>, vector<1x1x4x128xf32>
    %76 = vector.shape_cast %75 : vector<1x1x4x128xf32> to vector<4x128xf32>
    %77 = vector.broadcast %67 : f32 to vector<4x128xf32>
    %78 = arith.mulf %77, %76 : vector<4x128xf32>
    %79 = arith.addf %73, %78 : vector<4x128xf32>
    %c0_38 = arith.constant 0 : index
    %c384 = arith.constant 384 : index
    %80 = vector.load %arg10[%c0_38, %c384] : memref<4x1024xf32, #tpu.memory_space<vmem>>, vector<4x128xf32>
    tpu.vector_store %arg10[%c0_38, %c384], %79 {strides = array<i32>} : memref<4x1024xf32, #tpu.memory_space<vmem>>, vector<4x128xf32>,
    %c4_i32 = arith.constant 4 : i32
    %81 = arith.addi %0, %c4_i32 : i32
    %82 = arith.index_cast %81 : i32 to index
    %83 = memref.load %arg2[%82] : memref<8xi32, #tpu.memory_space<smem>>
    %c1_i32_39 = arith.constant 1 : i32
    %84 = arith.addi %83, %c1_i32_39 : i32
    %c3_i32_40 = arith.constant 3 : i32
    %85 = arith.minsi %84, %c3_i32_40 : i32
    %86 = arith.index_cast %81 : i32 to index
    %87 = memref.load %arg3[%86] : memref<8xf32, #tpu.memory_space<smem>>
    %cst_41 = arith.constant 1.000000e+00 : f32
    %88 = arith.subf %cst_41, %87 : f32
    %c0_42 = arith.constant 0 : index
    %89 = arith.index_cast %83 : i32 to index
    %c0_43 = arith.constant 0 : index
    %c0_44 = arith.constant 0 : index
    %90 = vector.load %arg5[%c0_42, %89, %c0_43, %c0_44] : memref<1x4x4x128xf32, #tpu.memory_space<vmem>>, vector<1x1x4x128xf32>
    %91 = vector.shape_cast %90 : vector<1x1x4x128xf32> to vector<4x128xf32>
    %92 = vector.broadcast %88 : f32 to vector<4x128xf32>
    %93 = arith.mulf %92, %91 : vector<4x128xf32>
    %c0_45 = arith.constant 0 : index
    %94 = arith.index_cast %85 : i32 to index
    %c0_46 = arith.constant 0 : index
    %c0_47 = arith.constant 0 : index
    %95 = vector.load %arg5[%c0_45, %94, %c0_46, %c0_47] : memref<1x4x4x128xf32, #tpu.memory_space<vmem>>, vector<1x1x4x128xf32>
    %96 = vector.shape_cast %95 : vector<1x1x4x128xf32> to vector<4x128xf32>
    %97 = vector.broadcast %87 : f32 to vector<4x128xf32>
    %98 = arith.mulf %97, %96 : vector<4x128xf32>
    %99 = arith.addf %93, %98 : vector<4x128xf32>
    %c0_48 = arith.constant 0 : index
    %c512 = arith.constant 512 : index
    %100 = vector.load %arg10[%c0_48, %c512] : memref<4x1024xf32, #tpu.memory_space<vmem>>, vector<4x128xf32>
    tpu.vector_store %arg10[%c0_48, %c512], %99 {strides = array<i32>} : memref<4x1024xf32, #tpu.memory_space<vmem>>, vector<4x128xf32>,
    %c5_i32 = arith.constant 5 : i32
    %101 = arith.addi %0, %c5_i32 : i32
    %102 = arith.index_cast %101 : i32 to index
    %103 = memref.load %arg2[%102] : memref<8xi32, #tpu.memory_space<smem>>
    %c1_i32_49 = arith.constant 1 : i32
    %104 = arith.addi %103, %c1_i32_49 : i32
    %c3_i32_50 = arith.constant 3 : i32
    %105 = arith.minsi %104, %c3_i32_50 : i32
    %106 = arith.index_cast %101 : i32 to index
    %107 = memref.load %arg3[%106] : memref<8xf32, #tpu.memory_space<smem>>
    %cst_51 = arith.constant 1.000000e+00 : f32
    %108 = arith.subf %cst_51, %107 : f32
    %c0_52 = arith.constant 0 : index
    %109 = arith.index_cast %103 : i32 to index
    %c0_53 = arith.constant 0 : index
    %c0_54 = arith.constant 0 : index
    %110 = vector.load %arg5[%c0_52, %109, %c0_53, %c0_54] : memref<1x4x4x128xf32, #tpu.memory_space<vmem>>, vector<1x1x4x128xf32>
    %111 = vector.shape_cast %110 : vector<1x1x4x128xf32> to vector<4x128xf32>
    %112 = vector.broadcast %108 : f32 to vector<4x128xf32>
    %113 = arith.mulf %112, %111 : vector<4x128xf32>
    %c0_55 = arith.constant 0 : index
    %114 = arith.index_cast %105 : i32 to index
    %c0_56 = arith.constant 0 : index
    %c0_57 = arith.constant 0 : index
    %115 = vector.load %arg5[%c0_55, %114, %c0_56, %c0_57] : memref<1x4x4x128xf32, #tpu.memory_space<vmem>>, vector<1x1x4x128xf32>
    %116 = vector.shape_cast %115 : vector<1x1x4x128xf32> to vector<4x128xf32>
    %117 = vector.broadcast %107 : f32 to vector<4x128xf32>
    %118 = arith.mulf %117, %116 : vector<4x128xf32>
    %119 = arith.addf %113, %118 : vector<4x128xf32>
    %c0_58 = arith.constant 0 : index
    %c640 = arith.constant 640 : index
    %120 = vector.load %arg10[%c0_58, %c640] : memref<4x1024xf32, #tpu.memory_space<vmem>>, vector<4x128xf32>
    tpu.vector_store %arg10[%c0_58, %c640], %119 {strides = array<i32>} : memref<4x1024xf32, #tpu.memory_space<vmem>>, vector<4x128xf32>,
    %c6_i32 = arith.constant 6 : i32
    %121 = arith.addi %0, %c6_i32 : i32
    %122 = arith.index_cast %121 : i32 to index
    %123 = memref.load %arg2[%122] : memref<8xi32, #tpu.memory_space<smem>>
    %c1_i32_59 = arith.constant 1 : i32
    %124 = arith.addi %123, %c1_i32_59 : i32
    %c3_i32_60 = arith.constant 3 : i32
    %125 = arith.minsi %124, %c3_i32_60 : i32
    %126 = arith.index_cast %121 : i32 to index
    %127 = memref.load %arg3[%126] : memref<8xf32, #tpu.memory_space<smem>>
    %cst_61 = arith.constant 1.000000e+00 : f32
    %128 = arith.subf %cst_61, %127 : f32
    %c0_62 = arith.constant 0 : index
    %129 = arith.index_cast %123 : i32 to index
    %c0_63 = arith.constant 0 : index
    %c0_64 = arith.constant 0 : index
    %130 = vector.load %arg5[%c0_62, %129, %c0_63, %c0_64] : memref<1x4x4x128xf32, #tpu.memory_space<vmem>>, vector<1x1x4x128xf32>
    %131 = vector.shape_cast %130 : vector<1x1x4x128xf32> to vector<4x128xf32>
    %132 = vector.broadcast %128 : f32 to vector<4x128xf32>
    %133 = arith.mulf %132, %131 : vector<4x128xf32>
    %c0_65 = arith.constant 0 : index
    %134 = arith.index_cast %125 : i32 to index
    %c0_66 = arith.constant 0 : index
    %c0_67 = arith.constant 0 : index
    %135 = vector.load %arg5[%c0_65, %134, %c0_66, %c0_67] : memref<1x4x4x128xf32, #tpu.memory_space<vmem>>, vector<1x1x4x128xf32>
    %136 = vector.shape_cast %135 : vector<1x1x4x128xf32> to vector<4x128xf32>
    %137 = vector.broadcast %127 : f32 to vector<4x128xf32>
    %138 = arith.mulf %137, %136 : vector<4x128xf32>
    %139 = arith.addf %133, %138 : vector<4x128xf32>
    %c0_68 = arith.constant 0 : index
    %c768 = arith.constant 768 : index
    %140 = vector.load %arg10[%c0_68, %c768] : memref<4x1024xf32, #tpu.memory_space<vmem>>, vector<4x128xf32>
    tpu.vector_store %arg10[%c0_68, %c768], %139 {strides = array<i32>} : memref<4x1024xf32, #tpu.memory_space<vmem>>, vector<4x128xf32>,
    %c7_i32 = arith.constant 7 : i32
    %141 = arith.addi %0, %c7_i32 : i32
    %142 = arith.index_cast %141 : i32 to index
    %143 = memref.load %arg2[%142] : memref<8xi32, #tpu.memory_space<smem>>
    %c1_i32_69 = arith.constant 1 : i32
    %144 = arith.addi %143, %c1_i32_69 : i32
    %c3_i32_70 = arith.constant 3 : i32
    %145 = arith.minsi %144, %c3_i32_70 : i32
    %146 = arith.index_cast %141 : i32 to index
    %147 = memref.load %arg3[%146] : memref<8xf32, #tpu.memory_space<smem>>
    %cst_71 = arith.constant 1.000000e+00 : f32
    %148 = arith.subf %cst_71, %147 : f32
    %c0_72 = arith.constant 0 : index
    %149 = arith.index_cast %143 : i32 to index
    %c0_73 = arith.constant 0 : index
    %c0_74 = arith.constant 0 : index
    %150 = vector.load %arg5[%c0_72, %149, %c0_73, %c0_74] : memref<1x4x4x128xf32, #tpu.memory_space<vmem>>, vector<1x1x4x128xf32>
    %151 = vector.shape_cast %150 : vector<1x1x4x128xf32> to vector<4x128xf32>
    %152 = vector.broadcast %148 : f32 to vector<4x128xf32>
    %153 = arith.mulf %152, %151 : vector<4x128xf32>
    %c0_75 = arith.constant 0 : index
    %154 = arith.index_cast %145 : i32 to index
    %c0_76 = arith.constant 0 : index
    %c0_77 = arith.constant 0 : index
    %155 = vector.load %arg5[%c0_75, %154, %c0_76, %c0_77] : memref<1x4x4x128xf32, #tpu.memory_space<vmem>>, vector<1x1x4x128xf32>
    %156 = vector.shape_cast %155 : vector<1x1x4x128xf32> to vector<4x128xf32>
    %157 = vector.broadcast %147 : f32 to vector<4x128xf32>
    %158 = arith.mulf %157, %156 : vector<4x128xf32>
    %159 = arith.addf %153, %158 : vector<4x128xf32>
    %c0_78 = arith.constant 0 : index
    %c896 = arith.constant 896 : index
    %160 = vector.load %arg10[%c0_78, %c896] : memref<4x1024xf32, #tpu.memory_space<vmem>>, vector<4x128xf32>
    tpu.vector_store %arg10[%c0_78, %c896], %159 {strides = array<i32>} : memref<4x1024xf32, #tpu.memory_space<vmem>>, vector<4x128xf32>,
    %c0_79 = arith.constant 0 : index
    %c0_80 = arith.constant 0 : index
    %161 = vector.load %arg4[%c0_79, %c0_80] : memref<8x4xf32, #tpu.memory_space<vmem>>, vector<8x4xf32>
    %c0_81 = arith.constant 0 : index
    %c0_82 = arith.constant 0 : index
    %162 = vector.load %arg10[%c0_81, %c0_82] : memref<4x1024xf32, #tpu.memory_space<vmem>>, vector<4x1024xf32>
    %cst_83 = arith.constant dense<0.000000e+00> : vector<8x1024xf32>
    %163 = tpu.matmul %161, %162, %cst_83 {dimension_numbers = #tpu.dot_dimension_numbers<[1], [0], [0], [1], [0, 0, 1, 1], [], []>} : vector<8x4xf32>, vector<4x1024xf32>, vector<8x1024xf32> -> vector<8x1024xf32>
    %164 = vector.extract_strided_slice %163 {offsets = [0, 0], sizes = [8, 128], strides = [1, 1]} : vector<8x1024xf32> to vector<8x128xf32>
    %165 = arith.truncf %164 : vector<8x128xf32> to vector<8x128xbf16>
    %c0_84 = arith.constant 0 : index
    %c0_85 = arith.constant 0 : index
    %c0_86 = arith.constant 0 : index
    %c0_87 = arith.constant 0 : index
    %166 = vector.load %arg8[%c0_84, %c0_85, %c0_86, %c0_87] : memref<1x8x8x128xbf16, #tpu.memory_space<vmem>>, vector<1x1x8x128xbf16>
    %167 = vector.shape_cast %166 : vector<1x1x8x128xbf16> to vector<8x128xbf16>
    %168 = vector.shape_cast %165 : vector<8x128xbf16> to vector<1x1x8x128xbf16>
    tpu.vector_store %arg8[%c0_84, %c0_85, %c0_86, %c0_87], %168 {strides = array<i32>} : memref<1x8x8x128xbf16, #tpu.memory_space<vmem>>, vector<1x1x8x128xbf16>,
    %169 = vector.extract_strided_slice %163 {offsets = [0, 128], sizes = [8, 128], strides = [1, 1]} : vector<8x1024xf32> to vector<8x128xf32>
    %170 = arith.truncf %169 : vector<8x128xf32> to vector<8x128xbf16>
    %c0_88 = arith.constant 0 : index
    %c1 = arith.constant 1 : index
    %c0_89 = arith.constant 0 : index
    %c0_90 = arith.constant 0 : index
    %171 = vector.load %arg8[%c0_88, %c1, %c0_89, %c0_90] : memref<1x8x8x128xbf16, #tpu.memory_space<vmem>>, vector<1x1x8x128xbf16>
    %172 = vector.shape_cast %171 : vector<1x1x8x128xbf16> to vector<8x128xbf16>
    %173 = vector.shape_cast %170 : vector<8x128xbf16> to vector<1x1x8x128xbf16>
    tpu.vector_store %arg8[%c0_88, %c1, %c0_89, %c0_90], %173 {strides = array<i32>} : memref<1x8x8x128xbf16, #tpu.memory_space<vmem>>, vector<1x1x8x128xbf16>,
    %174 = vector.extract_strided_slice %163 {offsets = [0, 256], sizes = [8, 128], strides = [1, 1]} : vector<8x1024xf32> to vector<8x128xf32>
    %175 = arith.truncf %174 : vector<8x128xf32> to vector<8x128xbf16>
    %c0_91 = arith.constant 0 : index
    %c2 = arith.constant 2 : index
    %c0_92 = arith.constant 0 : index
    %c0_93 = arith.constant 0 : index
    %176 = vector.load %arg8[%c0_91, %c2, %c0_92, %c0_93] : memref<1x8x8x128xbf16, #tpu.memory_space<vmem>>, vector<1x1x8x128xbf16>
    %177 = vector.shape_cast %176 : vector<1x1x8x128xbf16> to vector<8x128xbf16>
    %178 = vector.shape_cast %175 : vector<8x128xbf16> to vector<1x1x8x128xbf16>
    tpu.vector_store %arg8[%c0_91, %c2, %c0_92, %c0_93], %178 {strides = array<i32>} : memref<1x8x8x128xbf16, #tpu.memory_space<vmem>>, vector<1x1x8x128xbf16>,
    %179 = vector.extract_strided_slice %163 {offsets = [0, 384], sizes = [8, 128], strides = [1, 1]} : vector<8x1024xf32> to vector<8x128xf32>
    %180 = arith.truncf %179 : vector<8x128xf32> to vector<8x128xbf16>
    %c0_94 = arith.constant 0 : index
    %c3 = arith.constant 3 : index
    %c0_95 = arith.constant 0 : index
    %c0_96 = arith.constant 0 : index
    %181 = vector.load %arg8[%c0_94, %c3, %c0_95, %c0_96] : memref<1x8x8x128xbf16, #tpu.memory_space<vmem>>, vector<1x1x8x128xbf16>
    %182 = vector.shape_cast %181 : vector<1x1x8x128xbf16> to vector<8x128xbf16>
    %183 = vector.shape_cast %180 : vector<8x128xbf16> to vector<1x1x8x128xbf16>
    tpu.vector_store %arg8[%c0_94, %c3, %c0_95, %c0_96], %183 {strides = array<i32>} : memref<1x8x8x128xbf16, #tpu.memory_space<vmem>>, vector<1x1x8x128xbf16>,
    %184 = vector.extract_strided_slice %163 {offsets = [0, 512], sizes = [8, 128], strides = [1, 1]} : vector<8x1024xf32> to vector<8x128xf32>
    %185 = arith.truncf %184 : vector<8x128xf32> to vector<8x128xbf16>
    %c0_97 = arith.constant 0 : index
    %c4 = arith.constant 4 : index
    %c0_98 = arith.constant 0 : index
    %c0_99 = arith.constant 0 : index
    %186 = vector.load %arg8[%c0_97, %c4, %c0_98, %c0_99] : memref<1x8x8x128xbf16, #tpu.memory_space<vmem>>, vector<1x1x8x128xbf16>
    %187 = vector.shape_cast %186 : vector<1x1x8x128xbf16> to vector<8x128xbf16>
    %188 = vector.shape_cast %185 : vector<8x128xbf16> to vector<1x1x8x128xbf16>
    tpu.vector_store %arg8[%c0_97, %c4, %c0_98, %c0_99], %188 {strides = array<i32>} : memref<1x8x8x128xbf16, #tpu.memory_space<vmem>>, vector<1x1x8x128xbf16>,
    %189 = vector.extract_strided_slice %163 {offsets = [0, 640], sizes = [8, 128], strides = [1, 1]} : vector<8x1024xf32> to vector<8x128xf32>
    %190 = arith.truncf %189 : vector<8x128xf32> to vector<8x128xbf16>
    %c0_100 = arith.constant 0 : index
    %c5 = arith.constant 5 : index
    %c0_101 = arith.constant 0 : index
    %c0_102 = arith.constant 0 : index
    %191 = vector.load %arg8[%c0_100, %c5, %c0_101, %c0_102] : memref<1x8x8x128xbf16, #tpu.memory_space<vmem>>, vector<1x1x8x128xbf16>
    %192 = vector.shape_cast %191 : vector<1x1x8x128xbf16> to vector<8x128xbf16>
    %193 = vector.shape_cast %190 : vector<8x128xbf16> to vector<1x1x8x128xbf16>
    tpu.vector_store %arg8[%c0_100, %c5, %c0_101, %c0_102], %193 {strides = array<i32>} : memref<1x8x8x128xbf16, #tpu.memory_space<vmem>>, vector<1x1x8x128xbf16>,
    %194 = vector.extract_strided_slice %163 {offsets = [0, 768], sizes = [8, 128], strides = [1, 1]} : vector<8x1024xf32> to vector<8x128xf32>
    %195 = arith.truncf %194 : vector<8x128xf32> to vector<8x128xbf16>
    %c0_103 = arith.constant 0 : index
    %c6 = arith.constant 6 : index
    %c0_104 = arith.constant 0 : index
    %c0_105 = arith.constant 0 : index
    %196 = vector.load %arg8[%c0_103, %c6, %c0_104, %c0_105] : memref<1x8x8x128xbf16, #tpu.memory_space<vmem>>, vector<1x1x8x128xbf16>
    %197 = vector.shape_cast %196 : vector<1x1x8x128xbf16> to vector<8x128xbf16>
    %198 = vector.shape_cast %195 : vector<8x128xbf16> to vector<1x1x8x128xbf16>
    tpu.vector_store %arg8[%c0_103, %c6, %c0_104, %c0_105], %198 {strides = array<i32>} : memref<1x8x8x128xbf16, #tpu.memory_space<vmem>>, vector<1x1x8x128xbf16>,
    %199 = vector.extract_strided_slice %163 {offsets = [0, 896], sizes = [8, 128], strides = [1, 1]} : vector<8x1024xf32> to vector<8x128xf32>
    %200 = arith.truncf %199 : vector<8x128xf32> to vector<8x128xbf16>
    %c0_106 = arith.constant 0 : index
    %c7 = arith.constant 7 : index
    %c0_107 = arith.constant 0 : index
    %c0_108 = arith.constant 0 : index
    %201 = vector.load %arg8[%c0_106, %c7, %c0_107, %c0_108] : memref<1x8x8x128xbf16, #tpu.memory_space<vmem>>, vector<1x1x8x128xbf16>
    %202 = vector.shape_cast %201 : vector<1x1x8x128xbf16> to vector<8x128xbf16>
    %203 = vector.shape_cast %200 : vector<8x128xbf16> to vector<1x1x8x128xbf16>
    tpu.vector_store %arg8[%c0_106, %c7, %c0_107, %c0_108], %203 {strides = array<i32>} : memref<1x8x8x128xbf16, #tpu.memory_space<vmem>>, vector<1x1x8x128xbf16>,
    %c0_109 = arith.constant 0 : index
    %c0_110 = arith.constant 0 : index
    %c0_111 = arith.constant 0 : index
    %c0_112 = arith.constant 0 : index
    %204 = vector.load %arg8[%c0_109, %c0_110, %c0_111, %c0_112] : memref<1x8x8x128xbf16, #tpu.memory_space<vmem>>, vector<1x8x8x128xbf16>
    %205 = vector.shape_cast %204 : vector<1x8x8x128xbf16> to vector<8x8x128xbf16>
    %206 = vector.shape_cast %205 : vector<8x8x128xbf16> to vector<64x128xbf16>
    %c0_113 = arith.constant 0 : index
    %c0_114 = arith.constant 0 : index
    %c0_115 = arith.constant 0 : index
    %c0_116 = arith.constant 0 : index
    %207 = vector.load %arg6[%c0_113, %c0_114, %c0_115, %c0_116] : memref<1x8x8x128xf32, #tpu.memory_space<vmem>>, vector<1x8x8x128xf32>
    %208 = vector.shape_cast %207 : vector<1x8x8x128xf32> to vector<8x8x128xf32>
    %209 = vector.shape_cast %208 : vector<8x8x128xf32> to vector<64x128xf32>
    %210 = arith.truncf %209 : vector<64x128xf32> to vector<64x128xbf16>
    %211 = tpu.concatenate %206, %210 in 1 : vector<64x128xbf16>, vector<64x128xbf16> -> vector<64x256xbf16>
    %c0_117 = arith.constant 0 : index
    %c0_118 = arith.constant 0 : index
    %212 = vector.load %arg7[%c0_117, %c0_118] : memref<256x128xbf16, #tpu.memory_space<vmem>>, vector<256x128xbf16>
    %cst_119 = arith.constant dense<0.000000e+00> : vector<64x128xf32>
    %213 = tpu.matmul %211, %212, %cst_119 {dimension_numbers = #tpu.dot_dimension_numbers<[1], [0], [0], [1], [0, 0, 1, 1], [], []>} : vector<64x256xbf16>, vector<256x128xbf16>, vector<64x128xf32> -> vector<64x128xf32>
    %cst_120 = arith.constant dense<0.000000e+00> : vector<128xf32>
    %214 = vector.multi_reduction <add>, %213, %cst_120 [0] : vector<64x128xf32> to vector<128xf32>
    %215 = vector.shape_cast %214 : vector<128xf32> to vector<1x128xf32>
    %216 = arith.mulf %213, %213 : vector<64x128xf32>
    %cst_121 = arith.constant dense<0.000000e+00> : vector<128xf32>
    %217 = vector.multi_reduction <add>, %216, %cst_121 [0] : vector<64x128xf32> to vector<128xf32>
    %218 = vector.shape_cast %217 : vector<128xf32> to vector<1x128xf32>
    %219 = tpu.concatenate %215, %218 in 0 : vector<1x128xf32>, vector<1x128xf32> -> vector<2x128xf32>
    %c0_122 = arith.constant 0 : index
    %c0_123 = arith.constant 0 : index
    %c0_124 = arith.constant 0 : index
    %c0_125 = arith.constant 0 : index
    %220 = vector.load %arg9[%c0_122, %c0_123, %c0_124, %c0_125] : memref<1x1x2x128xf32, #tpu.memory_space<vmem>>, vector<1x1x2x128xf32>
    %221 = vector.shape_cast %220 : vector<1x1x2x128xf32> to vector<2x128xf32>
    %222 = vector.shape_cast %219 : vector<2x128xf32> to vector<1x1x2x128xf32>
    tpu.vector_store %arg9[%c0_122, %c0_123, %c0_124, %c0_125], %222 {strides = array<i32>} : memref<1x1x2x128xf32, #tpu.memory_space<vmem>>, vector<1x1x2x128xf32>,
    return
  }
  func.func @transform_0(%arg0: i32, %arg1: i32) -> i32 {
    %c0_i32 = arith.constant 0 : i32
    %c0_i32_0 = arith.constant 0 : i32
    return %c0_i32 : i32
  }
  func.func @transform_1(%arg0: i32, %arg1: i32) -> i32 {
    %c0_i32 = arith.constant 0 : i32
    %c0_i32_0 = arith.constant 0 : i32
    return %c0_i32 : i32
  }
  func.func @transform_2(%arg0: i32, %arg1: i32) -> (i32, i32) {
    %c0_i32 = arith.constant 0 : i32
    %c0_i32_0 = arith.constant 0 : i32
    %c0_i32_1 = arith.constant 0 : i32
    return %c0_i32, %c0_i32_0 : i32, i32
  }
  func.func @transform_3(%arg0: i32, %arg1: i32) -> (i32, i32, i32, i32) {
    %c0_i32 = arith.constant 0 : i32
    %c0_i32_0 = arith.constant 0 : i32
    %c0_i32_1 = arith.constant 0 : i32
    %c0_i32_2 = arith.constant 0 : i32
    return %arg0, %c0_i32, %c0_i32_0, %c0_i32_1 : i32, i32, i32, i32
  }
  func.func @transform_4(%arg0: i32, %arg1: i32) -> (i32, i32, i32, i32) {
    %c0_i32 = arith.constant 0 : i32
    %c0_i32_0 = arith.constant 0 : i32
    %c0_i32_1 = arith.constant 0 : i32
    return %arg0, %arg1, %c0_i32, %c0_i32_0 : i32, i32, i32, i32
  }
  func.func @transform_5(%arg0: i32, %arg1: i32) -> (i32, i32) {
    %c0_i32 = arith.constant 0 : i32
    %c0_i32_0 = arith.constant 0 : i32
    %c0_i32_1 = arith.constant 0 : i32
    return %c0_i32, %c0_i32_0 : i32, i32
  }
  func.func @transform_6(%arg0: i32, %arg1: i32) -> (i32, i32, i32, i32) {
    %c0_i32 = arith.constant 0 : i32
    %c0_i32_0 = arith.constant 0 : i32
    %c0_i32_1 = arith.constant 0 : i32
    return %arg0, %arg1, %c0_i32, %c0_i32_0 : i32, i32, i32, i32
  }
  func.func @transform_7(%arg0: i32, %arg1: i32) -> (i32, i32, i32, i32) {
    %c0_i32 = arith.constant 0 : i32
    %c0_i32_0 = arith.constant 0 : i32
    %c0_i32_1 = arith.constant 0 : i32
    return %arg0, %arg1, %c0_i32, %c0_i32_0 : i32, i32, i32, i32
  }
}

</mosaic_0001>

<llo_original>
// kernel: tpu_custom_call.1
$region0: #{tpu_custom_call.1}
  #allocation0 [shape = 'u32[]', space=smem, size = 0x4, offset = 0x4, fixed_abs, tag = 'smem constant byte address 0x4 - core index']
  #allocation1 [shape = 'u32[144,128]{1,0:T(1,128)}', space=vmem, size = 0x12000, scoped, tag = 'internal scratch']
  #allocation2 [shape = 'f32[4,1024]{1,0:T(4,128)}', space=vmem, size = 0x4000, scoped, tag = 'scratch operand']
  %s0 = inlined_call_operand.vmem [shape: s32[8], index: 0, kind: input, shape index: {}]
  %s1 = inlined_call_operand.vmem [shape: f32[8], index: 1, kind: input, shape index: {}]
  %s2 = inlined_call_operand.vmem [shape: f32[8,4], index: 2, kind: input, shape index: {}]
  %s3 = inlined_call_operand.hbm [shape: f32[2,4,4,128], index: 3, kind: input, shape index: {}]
  %s4 = inlined_call_operand.hbm [shape: f32[2,8,8,128], index: 4, kind: input, shape index: {}]
  %s5 = inlined_call_operand.hbm [shape: bf16[256,128], index: 5, kind: input, shape index: {}]
  %s6 = inlined_call_operand.hbm [shape: bf16[2,8,8,128], index: 6, kind: output, shape index: {0}]
  %s7 = inlined_call_operand.hbm [shape: f32[2,1,2,128], index: 7, kind: output, shape index: {1}]
  %8 = xla_tuple %s6, %s7
  %s9 = sld [smem:[#allocation0]]
  $region85: #{tpu_custom_call.1} parent=0
    _
  %s11 = ssub.s32 1, %s9
  %s12 = scalar_select 0, %s11, %s9
  $region1: #{tpu_custom_call.1} parent=0
    #allocation3 [shape = 'u8[512]{0}', space=smem, size = 0x200, scoped, tag = 'input window, operand 0, single buffered']
    #allocation4 [shape = 's32[2]{0}', space=sflag, size = 0x8, scoped, tag = 'scoped memory for tpu_custom_call.1']
    #allocation5 [shape = 's32[2]{0}', space=sflag, size = 0x8, scoped, tag = 'scoped memory for tpu_custom_call.1']
    #allocation6 [shape = 's32[2]{0}', space=sflag, size = 0x8, scoped, tag = 'scoped memory for tpu_custom_call.1']
    #allocation7 [shape = 'u8[512]{0}', space=smem, size = 0x200, scoped, tag = 'input window, operand 1, single buffered']
    #allocation8 [shape = 's32[1]{0}', space=sflag, size = 0x4, scoped, tag = 'scoped memory for tpu_custom_call.1']
    #allocation9 [shape = 'u8[16384]{0}', space=vmem, size = 0x4000, scoped, tag = 'input window, operand 3']
    #allocation10 [shape = 'u8[65536]{0}', space=vmem, size = 0x10000, scoped, tag = 'input window, operand 4']
    #allocation11 [shape = 's32[2]{0}', space=sflag, size = 0x8, scoped, tag = 'scoped memory for tpu_custom_call.1']
    #allocation12 [shape = 'u8[65536]{0}', space=vmem, size = 0x10000, scoped, tag = 'input window, operand 5, single buffered']
    #allocation13 [shape = 'u8[32768]{0}', space=vmem, size = 0x8000, scoped, tag = 'output window, operand 0']
    #allocation14 [shape = 'u8[2048]{0}', space=vmem, size = 0x800, scoped, tag = 'output window, operand 1']
    #allocation15 [shape = 's32[2]{0}', space=sflag, size = 0x8, scoped, tag = 'scoped memory for tpu_custom_call.1']
    %13 = vsyncpa [#allocation6], 0
    %14 = vsyncpa [#allocation8], 0
    %15 = vsyncpa [#allocation4], 0
    %s16 = scalar_lea.sflag [#allocation4], 1
    %17 = vsyncpa %s16, 0
    %18 = vsyncpa [#allocation11], 0
    %s19 = scalar_lea.sflag [#allocation11], 1
    %20 = vsyncpa %s19, 0
    %21 = vsyncpa [#allocation5], 0
    %s22 = scalar_lea.sflag [#allocation5], 1
    %23 = vsyncpa %s22, 0
    %24 = vsyncpa [#allocation15], 0
    %s25 = scalar_lea.sflag [#allocation15], 1
    %26 = vsyncpa %s25, 0
    loop: start=0, step=1, limit=4
    $region2: #{tpu_custom_call.1} parent=1 // loop_pre_header
      _
    $region3: #{tpu_custom_call.1} parent=1 // loop_header
      %s28 = sphi 0, %s32
      %p29 = scmp.ge.s32.totalorder %s28, 4
      %s35 = sphi 0, %s47
      %s36 = sphi 0, %s43
      %s37 = sphi 0, %s35
      %s38 = sphi 0, %s36
      %s39 = sphi 0, %s37
      %s40 = sphi 0, %s38
      %s48 = sphi 0, %s48
      %s50 = sphi 0, %s48
      %s51 = sphi 0, %s50
      %s65 = sphi 0, %s51
      %s69 = sphi 0, %s69
      %s71 = sphi 0, %s69
      %s72 = sphi 0, %s71
      %s86 = sphi 0, %s72
      %s90 = sphi 0, %s90
      %s92 = sphi 0, %s90
      %s93 = sphi 0, %s92
      %s107 = sphi 0, %s93
      %s113 = sphi 0, %s115
      %s116 = sphi 0, %s113
      %s117 = sphi 0, %s116
      %s133 = sphi 0, %s117
      %s141 = sphi 0, %s143
      %s144 = sphi 0, %s141
      %s145 = sphi 0, %s144
      %s161 = sphi 0, %s145
      %s165 = sphi 0, %s165
      %s167 = sphi 0, %s165
      %s168 = sphi 0, %s167
      %s182 = sphi 0, %s168
      %s190 = sphi 0, %s192
      %s193 = sphi 0, %s190
      %s194 = sphi 0, %s193
      %s210 = sphi 0, %s194
      %s218 = sphi 0, %s220
      %s221 = sphi 0, %s218
      %s222 = sphi 0, %s221
      %s238 = sphi 0, %s222
    $region4: #{tpu_custom_call.1} parent=1 // loop_header_branch
      %31 = sbr.rel (%p29) target = $region8
    $region5: #{tpu_custom_call.1} parent=1 // loop_body
      %s33 = ssub.s32 %s28, 1
      %s34 = ssub.s32 %s28, 2
      %s41 = sadd.s32 1, %s36
      %p42 = scmp.ge.s32.totalorder %s41, 1
      %s43 = scalar_select %p42, 0, %s41
      %s44 = sadd.s32 1, %s35
      %s45 = scalar_select %p42, %s44, %s35
      %p46 = scmp.ge.s32.totalorder %s45, 2
      %s47 = scalar_select %p46, 0, %s45
      %s49 = sadd.s32 %s48, 1
      %p52 = scmp.eq.s32.totalorder %s28, 1
      %p53 = scmp.ne.s32.totalorder %s48, %s50
      %p54 = scmp.eq.s32.totalorder %s28, 0
      %p55 = por %p53, %p54
      %p56 = scmp.ne.s32.totalorder %s48, %s50
      %p57 = scmp.eq.s32.totalorder %s33, 1
      %p58 = por %p56, %p57
      %p59 = scmp.ne.s32.totalorder %s50, %s51
      %p60 = scmp.eq.s32.totalorder %s33, 0
      %p61 = por %p59, %p60
      %p62 = scmp.ne.s32.totalorder %s50, %s51
      %p63 = scmp.eq.s32.totalorder %s34, 1
      %p64 = por %p62, %p63
      %p66 = scmp.ne.s32.totalorder %s51, %s65
      %p67 = scmp.eq.s32.totalorder %s34, 0
      %p68 = por %p66, %p67
      %s70 = sadd.s32 %s69, 1
      %p73 = scmp.eq.s32.totalorder %s28, 1
      %p74 = scmp.ne.s32.totalorder %s69, %s71
      %p75 = scmp.eq.s32.totalorder %s28, 0
      %p76 = por %p74, %p75
      %p77 = scmp.ne.s32.totalorder %s69, %s71
      %p78 = scmp.eq.s32.totalorder %s33, 1
      %p79 = por %p77, %p78
      %p80 = scmp.ne.s32.totalorder %s71, %s72
      %p81 = scmp.eq.s32.totalorder %s33, 0
      %p82 = por %p80, %p81
      %p83 = scmp.ne.s32.totalorder %s71, %s72
      %p84 = scmp.eq.s32.totalorder %s34, 1
      %p85 = por %p83, %p84
      %p87 = scmp.ne.s32.totalorder %s72, %s86
      %p88 = scmp.eq.s32.totalorder %s34, 0
      %p89 = por %p87, %p88
      %s91 = sadd.s32 %s90, 1
      %p94 = scmp.eq.s32.totalorder %s28, 1
      %p95 = scmp.ne.s32.totalorder %s90, %s92
      %p96 = scmp.eq.s32.totalorder %s28, 0
      %p97 = por %p95, %p96
      %p98 = scmp.ne.s32.totalorder %s90, %s92
      %p99 = scmp.eq.s32.totalorder %s33, 1
      %p100 = por %p98, %p99
      %p101 = scmp.ne.s32.totalorder %s92, %s93
      %p102 = scmp.eq.s32.totalorder %s33, 0
      %p103 = por %p101, %p102
      %p104 = scmp.ne.s32.totalorder %s92, %s93
      %p105 = scmp.eq.s32.totalorder %s34, 1
      %p106 = por %p104, %p105
      %p108 = scmp.ne.s32.totalorder %s93, %s107
      %p109 = scmp.eq.s32.totalorder %s34, 0
      %p110 = por %p108, %p109
      %s111 = ssub.s32 %s35, %s47
      %p112 = scmp.eq.s32.totalorder %s111, 0
      %s114 = sadd.s32 %s113, 1
      %s115 = scalar_select %p112, %s113, %s114
      %p118 = pneg %p112
      %p119 = scmp.eq.s32.totalorder %s28, 1
      %p120 = por %p118, %p119
      %p121 = scmp.ne.s32.totalorder %s113, %s116
      %p122 = scmp.eq.s32.totalorder %s28, 0
      %p123 = por %p121, %p122
      %p124 = scmp.ne.s32.totalorder %s113, %s116
      %p125 = scmp.eq.s32.totalorder %s33, 1
      %p126 = por %p124, %p125
      %p127 = scmp.ne.s32.totalorder %s116, %s117
      %p128 = scmp.eq.s32.totalorder %s33, 0
      %p129 = por %p127, %p128
      %p130 = scmp.ne.s32.totalorder %s116, %s117
      %p131 = scmp.eq.s32.totalorder %s34, 1
      %p132 = por %p130, %p131
      %p134 = scmp.ne.s32.totalorder %s117, %s133
      %p135 = scmp.eq.s32.totalorder %s34, 0
      %p136 = por %p134, %p135
      %s137 = ssub.s32 %s35, %s47
      %s138 = ssub.s32 %s36, %s43
      %s139 = sor.u32 %s137, %s138
      %p140 = scmp.eq.s32.totalorder %s139, 0
      %s142 = sadd.s32 %s141, 1
      %s143 = scalar_select %p140, %s141, %s142
      %p146 = pneg %p140
      %p147 = scmp.eq.s32.totalorder %s28, 1
      %p148 = por %p146, %p147
      %p149 = scmp.ne.s32.totalorder %s141, %s144
      %p150 = scmp.eq.s32.totalorder %s28, 0
      %p151 = por %p149, %p150
      %p152 = scmp.ne.s32.totalorder %s141, %s144
      %p153 = scmp.eq.s32.totalorder %s33, 1
      %p154 = por %p152, %p153
      %p155 = scmp.ne.s32.totalorder %s144, %s145
      %p156 = scmp.eq.s32.totalorder %s33, 0
      %p157 = por %p155, %p156
      %p158 = scmp.ne.s32.totalorder %s144, %s145
      %p159 = scmp.eq.s32.totalorder %s34, 1
      %p160 = por %p158, %p159
      %p162 = scmp.ne.s32.totalorder %s145, %s161
      %p163 = scmp.eq.s32.totalorder %s34, 0
      %p164 = por %p162, %p163
      %s166 = sadd.s32 %s165, 1
      %p169 = scmp.eq.s32.totalorder %s28, 1
      %p170 = scmp.ne.s32.totalorder %s165, %s167
      %p171 = scmp.eq.s32.totalorder %s28, 0
      %p172 = por %p170, %p171
      %p173 = scmp.ne.s32.totalorder %s165, %s167
      %p174 = scmp.eq.s32.totalorder %s33, 1
      %p175 = por %p173, %p174
      %p176 = scmp.ne.s32.totalorder %s167, %s168
      %p177 = scmp.eq.s32.totalorder %s33, 0
      %p178 = por %p176, %p177
      %p179 = scmp.ne.s32.totalorder %s167, %s168
      %p180 = scmp.eq.s32.totalorder %s34, 1
      %p181 = por %p179, %p180
      %p183 = scmp.ne.s32.totalorder %s168, %s182
      %p184 = scmp.eq.s32.totalorder %s34, 0
      %p185 = por %p183, %p184
      %s186 = ssub.s32 %s35, %s47
      %s187 = ssub.s32 %s36, %s43
      %s188 = sor.u32 %s186, %s187
      %p189 = scmp.eq.s32.totalorder %s188, 0
      %s191 = sadd.s32 %s190, 1
      %s192 = scalar_select %p189, %s190, %s191
      %p195 = pneg %p189
      %p196 = scmp.eq.s32.totalorder %s28, 1
      %p197 = por %p195, %p196
      %p198 = scmp.ne.s32.totalorder %s190, %s193
      %p199 = scmp.eq.s32.totalorder %s28, 0
      %p200 = por %p198, %p199
      %p201 = scmp.ne.s32.totalorder %s190, %s193
      %p202 = scmp.eq.s32.totalorder %s33, 1
      %p203 = por %p201, %p202
      %p204 = scmp.ne.s32.totalorder %s193, %s194
      %p205 = scmp.eq.s32.totalorder %s33, 0
      %p206 = por %p204, %p205
      %p207 = scmp.ne.s32.totalorder %s193, %s194
      %p208 = scmp.eq.s32.totalorder %s34, 1
      %p209 = por %p207, %p208
      %p211 = scmp.ne.s32.totalorder %s194, %s210
      %p212 = scmp.eq.s32.totalorder %s34, 0
      %p213 = por %p211, %p212
      %s214 = ssub.s32 %s35, %s47
      %s215 = ssub.s32 %s36, %s43
      %s216 = sor.u32 %s214, %s215
      %p217 = scmp.eq.s32.totalorder %s216, 0
      %s219 = sadd.s32 %s218, 1
      %s220 = scalar_select %p217, %s218, %s219
      %p223 = pneg %p217
      %p224 = scmp.eq.s32.totalorder %s28, 1
      %p225 = por %p223, %p224
      %p226 = scmp.ne.s32.totalorder %s218, %s221
      %p227 = scmp.eq.s32.totalorder %s28, 0
      %p228 = por %p226, %p227
      %p229 = scmp.ne.s32.totalorder %s218, %s221
      %p230 = scmp.eq.s32.totalorder %s33, 1
      %p231 = por %p229, %p230
      %p232 = scmp.ne.s32.totalorder %s221, %s222
      %p233 = scmp.eq.s32.totalorder %s33, 0
      %p234 = por %p232, %p233
      %p235 = scmp.ne.s32.totalorder %s221, %s222
      %p236 = scmp.eq.s32.totalorder %s34, 1
      %p237 = por %p235, %p236
      %p239 = scmp.ne.s32.totalorder %s222, %s238
      %p240 = scmp.eq.s32.totalorder %s34, 0
      %p241 = por %p239, %p240
      %p242 = scmp.le.s32.totalorder 1, %s28
      %p243 = scmp.lt.s32.totalorder %s28, 3
      %p244 = pnand %p242, %p243
      %p245 = pneg %p244
      // Predicated region
      $region9: #{tpu_custom_call.1} parent=5 // pred_check
        _
      $region10: #{tpu_custom_call.1} parent=5 // pred_check_branch
        %247 = sbr.rel (%p244) target = $region12
      $region11: #{tpu_custom_call.1} parent=5 // pred_region
        %s248 = ssub.s32 %s28, 1
        // Predicated region
        $region13: #{tpu_custom_call.1} parent=11 // pred_check
          %p249 = pneg %p61
        $region14: #{tpu_custom_call.1} parent=11 // pred_check_branch
          %251 = sbr.rel (%p249) target = $region16
        $region15: #{tpu_custom_call.1} parent=11 // pred_region
          %s253 = ssub.s32 16, 16
          %254 = vsyncadd [#allocation6], %s253
          %s256 = sshll.u32 %s0, 4
          %s257 = int_to_ptr.vmem [resolvable:$true] %s256
          %259 = dma.vmem_to_smem %s257, 16, [#allocation3], [#allocation6]
        $region16: #{tpu_custom_call.1} parent=11 // pred_fallthru
          _
        // Predicated region
        $region17: #{tpu_custom_call.1} parent=11 // pred_check
          %p260 = pneg %p82
        $region18: #{tpu_custom_call.1} parent=11 // pred_check_branch
          %262 = sbr.rel (%p260) target = $region20
        $region19: #{tpu_custom_call.1} parent=11 // pred_region
          %s264 = ssub.s32 16, 16
          %265 = vsyncadd [#allocation8], %s264
          %s267 = sshll.u32 %s1, 4
          %s268 = int_to_ptr.vmem [resolvable:$true] %s267
          %270 = dma.vmem_to_smem %s268, 16, [#allocation7], [#allocation8]
        $region20: #{tpu_custom_call.1} parent=11 // pred_fallthru
          _
        // Predicated region
        $region21: #{tpu_custom_call.1} parent=11 // pred_check
          %p271 = pneg %p103
        $region22: #{tpu_custom_call.1} parent=11 // pred_check_branch
          %273 = sbr.rel (%p271) target = $region24
        $region23: #{tpu_custom_call.1} parent=11 // pred_region
          _
        $region24: #{tpu_custom_call.1} parent=11 // pred_fallthru
          _
        // Predicated region
        $region25: #{tpu_custom_call.1} parent=11 // pred_check
          %p274 = pneg %p178
        $region26: #{tpu_custom_call.1} parent=11 // pred_check_branch
          %276 = sbr.rel (%p274) target = $region28
        $region27: #{tpu_custom_call.1} parent=11 // pred_region
          %s278 = ssub.s32 2048, 2048
          %279 = vsyncadd [#allocation11], %s278
          %s280 = sshll.u32 [#allocation12], 4
          %s281 = int_to_ptr.vmem [resolvable:$true] %s280
          %286 = dma.hbm_to_vmem [thread:$0]  %s5, 2048, %s281, [#allocation11], 64, 64, 4
        $region28: #{tpu_custom_call.1} parent=11 // pred_fallthru
          _
      $region12: #{tpu_custom_call.1} parent=5 // pred_fallthru
        _
      %p287 = scmp.lt.s32.totalorder %s28, 2
      // Predicated region
      $region29: #{tpu_custom_call.1} parent=5 // pred_check
        %p288 = pneg %p287
      $region30: #{tpu_custom_call.1} parent=5 // pred_check_branch
        %290 = sbr.rel (%p288) target = $region32
      $region31: #{tpu_custom_call.1} parent=5 // pred_region
        // Predicated region
        $region33: #{tpu_custom_call.1} parent=31 // pred_check
          %p291 = pneg %p123
        $region34: #{tpu_custom_call.1} parent=31 // pred_check_branch
          %293 = sbr.rel (%p291) target = $region36
        $region35: #{tpu_custom_call.1} parent=31 // pred_region
          %s294 = sand.u32 %s113, 1
          %s295 = scalar_lea.sflag [#allocation4], %s294
          %s296 = sand.u32 %s113, 1
          %s297 = smul.addr %s296, 16
          %s298 = scalar_lea.vmem [#allocation9], %s297
          %s300 = ssub.s32 256, 256
          %301 = vsyncadd %s295, %s300
          %s302 = smul.addr %s35, 4
          %s303 = smul.addr %s302, 64
          %s304 = scalar_lea.hbm %s3, %s303
          %s305 = sshll.u32 %s298, 4
          %s306 = int_to_ptr.vmem [resolvable:$true] %s305
          %311 = dma.hbm_to_vmem [thread:$0]  %s304, 256, %s306, %s295, 64, 64, 4
        $region36: #{tpu_custom_call.1} parent=31 // pred_fallthru
          _
        // Predicated region
        $region37: #{tpu_custom_call.1} parent=31 // pred_check
          %p312 = pneg %p151
        $region38: #{tpu_custom_call.1} parent=31 // pred_check_branch
          %314 = sbr.rel (%p312) target = $region40
        $region39: #{tpu_custom_call.1} parent=31 // pred_region
          %s315 = sand.u32 %s28, 1
          %s316 = scalar_lea.sflag [#allocation11], %s315
          %s317 = sand.u32 %s141, 1
          %s318 = smul.addr %s317, 64
          %s319 = scalar_lea.vmem [#allocation10], %s318
          %s320 = smul.u32 8, %s36
          %s322 = ssub.s32 1024, 1024
          %323 = vsyncadd %s316, %s322
          %s324 = smul.addr %s35, 8
          %s325 = sadd.s32 %s320, %s324
          %s326 = smul.addr %s325, 128
          %s327 = scalar_lea.hbm %s4, %s326
          %s328 = sshll.u32 %s319, 4
          %s329 = int_to_ptr.vmem [resolvable:$true] %s328
          %334 = dma.hbm_to_vmem [thread:$0]  %s327, 1024, %s329, %s316, 128, 128, 8
        $region40: #{tpu_custom_call.1} parent=31 // pred_fallthru
          _
      $region32: #{tpu_custom_call.1} parent=5 // pred_fallthru
        _
      %p335 = scmp.le.s32.totalorder 1, %s28
      %p336 = scmp.lt.s32.totalorder %s28, 3
      %p337 = pnand %p335, %p336
      %p338 = pneg %p337
      // Predicated region
      $region41: #{tpu_custom_call.1} parent=5 // pred_check
        _
      $region42: #{tpu_custom_call.1} parent=5 // pred_check_branch
        %340 = sbr.rel (%p337) target = $region44
      $region43: #{tpu_custom_call.1} parent=5 // pred_region
        %s341 = ssub.s32 %s28, 1
        // Predicated region
        $region45: #{tpu_custom_call.1} parent=43 // pred_check
          %p342 = pneg %p61
        $region46: #{tpu_custom_call.1} parent=43 // pred_check_branch
          %344 = sbr.rel (%p342) target = $region48
        $region47: #{tpu_custom_call.1} parent=43 // pred_region
          %345 = dma.done [#allocation6], 16
        $region48: #{tpu_custom_call.1} parent=43 // pred_fallthru
          _
        // Predicated region
        $region49: #{tpu_custom_call.1} parent=43 // pred_check
          %p346 = pneg %p82
        $region50: #{tpu_custom_call.1} parent=43 // pred_check_branch
          %348 = sbr.rel (%p346) target = $region52
        $region51: #{tpu_custom_call.1} parent=43 // pred_region
          %349 = dma.done [#allocation8], 16
        $region52: #{tpu_custom_call.1} parent=43 // pred_fallthru
          _
        %s350 = sand.u32 %s116, 1
        %s351 = scalar_lea.sflag [#allocation4], %s350
        %s352 = sand.u32 %s116, 1
        %s353 = smul.addr %s352, 16
        %s354 = scalar_lea.vmem [#allocation9], %s353
        // Predicated region
        $region53: #{tpu_custom_call.1} parent=43 // pred_check
          %p355 = pneg %p129
        $region54: #{tpu_custom_call.1} parent=43 // pred_check_branch
          %357 = sbr.rel (%p355) target = $region56
        $region55: #{tpu_custom_call.1} parent=43 // pred_region
          %358 = dma.done %s351, 256
        $region56: #{tpu_custom_call.1} parent=43 // pred_fallthru
          _
        %s359 = sand.u32 %s33, 1
        %s360 = scalar_lea.sflag [#allocation11], %s359
        %s361 = sand.u32 %s144, 1
        %s362 = smul.addr %s361, 64
        %s363 = scalar_lea.vmem [#allocation10], %s362
        // Predicated region
        $region57: #{tpu_custom_call.1} parent=43 // pred_check
          %p364 = pneg %p157
        $region58: #{tpu_custom_call.1} parent=43 // pred_check_branch
          %366 = sbr.rel (%p364) target = $region60
        $region59: #{tpu_custom_call.1} parent=43 // pred_region
          %367 = dma.done %s360, 1024
        $region60: #{tpu_custom_call.1} parent=43 // pred_fallthru
          _
        // Predicated region
        $region61: #{tpu_custom_call.1} parent=43 // pred_check
          %p368 = pneg %p178
        $region62: #{tpu_custom_call.1} parent=43 // pred_check_branch
          %370 = sbr.rel (%p368) target = $region64
        $region63: #{tpu_custom_call.1} parent=43 // pred_region
          %371 = dma.done [#allocation11], 2048
        $region64: #{tpu_custom_call.1} parent=43 // pred_fallthru
          _
        %372 = sfence
        %p373 = pneg %p61
        %p374 = pneg %p58
        %p375 = pneg %p82
        %p376 = pneg %p79
        %p377 = pneg %p103
        %p378 = pneg %p100
        %s379 = sand.u32 %s116, 1
        %s380 = scalar_lea.sflag [#allocation4], %s379
        %s381 = sand.u32 %s116, 1
        %s382 = smul.addr %s381, 16
        %s383 = scalar_lea.vmem [#allocation9], %s382
        %p384 = pneg %p129
        %p385 = pneg %p126
        %s386 = sand.u32 %s33, 1
        %s387 = scalar_lea.sflag [#allocation11], %s386
        %s388 = sand.u32 %s144, 1
        %s389 = smul.addr %s388, 64
        %s390 = scalar_lea.vmem [#allocation10], %s389
        %p391 = pneg %p157
        %p392 = pneg %p154
        %p393 = pneg %p178
        %p394 = pneg %p175
        %p395 = pneg %p206
        %p396 = pneg %p203
        %s397 = sand.u32 %s193, 1
        %s398 = scalar_lea.sflag [#allocation5], %s397
        %s399 = sand.u32 %s193, 1
        %s400 = smul.addr %s399, 32
        %s401 = scalar_lea.vmem [#allocation13], %s400
        %p402 = pneg %p234
        %p403 = pneg %p231
        %s404 = sand.u32 %s221, 1
        %s405 = scalar_lea.sflag [#allocation15], %s404
        %s406 = sand.u32 %s221, 1
        %s407 = smul.addr %s406, 2
        %s408 = scalar_lea.vmem [#allocation14], %s407
        %s409 = smul.u32 8, %s38
        %s410 = smul.u32 8, %s38
        %s412 = smul.u32 %s38, 8
        %s413 = sld [smem:[#allocation3 + %s412]]
        %s414 = sadd.s32 %s413, 1
        %p415 = scmp.lt.s32.totalorder %s414, 3
        %s416 = scalar_select %p415, %s414, 3
        %s417 = sld [smem:[#allocation7 + %s412]]
        %s418 = ssub.f32 1.0, %s417
        %s419 = smul.u32 %s413, 4
        %s420 = scalar_lea.vmem %s354, %s419 [#allocation9]
        %v421 = vld [vmem:[%s420] sm:$0xf]
        %v422 = vstv %s418
        %v423 = vmul.f32 %v422, %v421
        %s424 = smul.u32 %s416, 4
        %s425 = scalar_lea.vmem %s354, %s424 [#allocation9]
        %v426 = vld [vmem:[%s425] sm:$0xf]
        %v427 = vstv %s417
        %v428 = vmul.f32 %v427, %v426
        %v429 = vadd.f32 %v423, %v428
        %430 = vst [vmem:[#allocation2] sm:$0xf] %v429
        %s431 = sadd.s32 %s412, 1
        %s432 = sld [smem:[#allocation3 + %s431]]
        %s433 = sadd.s32 %s432, 1
        %p434 = scmp.lt.s32.totalorder %s433, 3
        %s435 = scalar_select %p434, %s433, 3
        %s436 = sld [smem:[#allocation7 + %s431]]
        %s437 = ssub.f32 1.0, %s436
        %s438 = smul.u32 %s432, 4
        %s439 = scalar_lea.vmem %s354, %s438 [#allocation9]
        %v440 = vld [vmem:[%s439] sm:$0xf]
        %v441 = vstv %s437
        %v442 = vmul.f32 %v441, %v440
        %s443 = smul.u32 %s435, 4
        %s444 = scalar_lea.vmem %s354, %s443 [#allocation9]
        %v445 = vld [vmem:[%s444] sm:$0xf]
        %v446 = vstv %s436
        %v447 = vmul.f32 %v446, %v445
        %v448 = vadd.f32 %v442, %v447
        %449 = vst [vmem:[#allocation2 + $0x4] sm:$0xf] %v448
        %s450 = sadd.s32 %s412, 2
        %s451 = sld [smem:[#allocation3 + %s450]]
        %s452 = sadd.s32 %s451, 1
        %p453 = scmp.lt.s32.totalorder %s452, 3
        %s454 = scalar_select %p453, %s452, 3
        %s455 = sld [smem:[#allocation7 + %s450]]
        %s456 = ssub.f32 1.0, %s455
        %s457 = smul.u32 %s451, 4
        %s458 = scalar_lea.vmem %s354, %s457 [#allocation9]
        %v459 = vld [vmem:[%s458] sm:$0xf]
        %v460 = vstv %s456
        %v461 = vmul.f32 %v460, %v459
        %s462 = smul.u32 %s454, 4
        %s463 = scalar_lea.vmem %s354, %s462 [#allocation9]
        %v464 = vld [vmem:[%s463] sm:$0xf]
        %v465 = vstv %s455
        %v466 = vmul.f32 %v465, %v464
        %v467 = vadd.f32 %v461, %v466
        %468 = vst [vmem:[#allocation2 + $0x8] sm:$0xf] %v467
        %s469 = sadd.s32 %s412, 3
        %s470 = sld [smem:[#allocation3 + %s469]]
        %s471 = sadd.s32 %s470, 1
        %p472 = scmp.lt.s32.totalorder %s471, 3
        %s473 = scalar_select %p472, %s471, 3
        %s474 = sld [smem:[#allocation7 + %s469]]
        %s475 = ssub.f32 1.0, %s474
        %s476 = smul.u32 %s470, 4
        %s477 = scalar_lea.vmem %s354, %s476 [#allocation9]
        %v478 = vld [vmem:[%s477] sm:$0xf]
        %v479 = vstv %s475
        %v480 = vmul.f32 %v479, %v478
        %s481 = smul.u32 %s473, 4
        %s482 = scalar_lea.vmem %s354, %s481 [#allocation9]
        %v483 = vld [vmem:[%s482] sm:$0xf]
        %v484 = vstv %s474
        %v485 = vmul.f32 %v484, %v483
        %v486 = vadd.f32 %v480, %v485
        %487 = vst [vmem:[#allocation2 + $0xc] sm:$0xf] %v486
        %s488 = sadd.s32 %s412, 4
        %s489 = sld [smem:[#allocation3 + %s488]]
        %s490 = sadd.s32 %s489, 1
        %p491 = scmp.lt.s32.totalorder %s490, 3
        %s492 = scalar_select %p491, %s490, 3
        %s493 = sld [smem:[#allocation7 + %s488]]
        %s494 = ssub.f32 1.0, %s493
        %s495 = smul.u32 %s489, 4
        %s496 = scalar_lea.vmem %s354, %s495 [#allocation9]
        %v497 = vld [vmem:[%s496] sm:$0xf]
        %v498 = vstv %s494
        %v499 = vmul.f32 %v498, %v497
        %s500 = smul.u32 %s492, 4
        %s501 = scalar_lea.vmem %s354, %s500 [#allocation9]
        %v502 = vld [vmem:[%s501] sm:$0xf]
        %v503 = vstv %s493
        %v504 = vmul.f32 %v503, %v502
        %v505 = vadd.f32 %v499, %v504
        %506 = vst [vmem:[#allocation2 + $0x10] sm:$0xf] %v505
        %s507 = sadd.s32 %s412, 5
        %s508 = sld [smem:[#allocation3 + %s507]]
        %s509 = sadd.s32 %s508, 1
        %p510 = scmp.lt.s32.totalorder %s509, 3
        %s511 = scalar_select %p510, %s509, 3
        %s512 = sld [smem:[#allocation7 + %s507]]
        %s513 = ssub.f32 1.0, %s512
        %s514 = smul.u32 %s508, 4
        %s515 = scalar_lea.vmem %s354, %s514 [#allocation9]
        %v516 = vld [vmem:[%s515] sm:$0xf]
        %v517 = vstv %s513
        %v518 = vmul.f32 %v517, %v516
        %s519 = smul.u32 %s511, 4
        %s520 = scalar_lea.vmem %s354, %s519 [#allocation9]
        %v521 = vld [vmem:[%s520] sm:$0xf]
        %v522 = vstv %s512
        %v523 = vmul.f32 %v522, %v521
        %v524 = vadd.f32 %v518, %v523
        %525 = vst [vmem:[#allocation2 + $0x14] sm:$0xf] %v524
        %s526 = sadd.s32 %s412, 6
        %s527 = sld [smem:[#allocation3 + %s526]]
        %s528 = sadd.s32 %s527, 1
        %p529 = scmp.lt.s32.totalorder %s528, 3
        %s530 = scalar_select %p529, %s528, 3
        %s531 = sld [smem:[#allocation7 + %s526]]
        %s532 = ssub.f32 1.0, %s531
        %s533 = smul.u32 %s527, 4
        %s534 = scalar_lea.vmem %s354, %s533 [#allocation9]
        %v535 = vld [vmem:[%s534] sm:$0xf]
        %v536 = vstv %s532
        %v537 = vmul.f32 %v536, %v535
        %s538 = smul.u32 %s530, 4
        %s539 = scalar_lea.vmem %s354, %s538 [#allocation9]
        %v540 = vld [vmem:[%s539] sm:$0xf]
        %v541 = vstv %s531
        %v542 = vmul.f32 %v541, %v540
        %v543 = vadd.f32 %v537, %v542
        %544 = vst [vmem:[#allocation2 + $0x18] sm:$0xf] %v543
        %s545 = sadd.s32 %s412, 7
        %s546 = sld [smem:[#allocation3 + %s545]]
        %s547 = sadd.s32 %s546, 1
        %p548 = scmp.lt.s32.totalorder %s547, 3
        %s549 = scalar_select %p548, %s547, 3
        %s550 = sld [smem:[#allocation7 + %s545]]
        %s551 = ssub.f32 1.0, %s550
        %s552 = smul.u32 %s546, 4
        %s553 = scalar_lea.vmem %s354, %s552 [#allocation9]
        %v554 = vld [vmem:[%s553] sm:$0xf]
        %v555 = vstv %s551
        %v556 = vmul.f32 %v555, %v554
        %s557 = smul.u32 %s549, 4
        %s558 = scalar_lea.vmem %s354, %s557 [#allocation9]
        %v559 = vld [vmem:[%s558] sm:$0xf]
        %v560 = vstv %s550
        %v561 = vmul.f32 %v560, %v559
        %v562 = vadd.f32 %v556, %v561
        %563 = vst [vmem:[#allocation2 + $0x1c] sm:$0xf] %v562
        %v564 = vld [vmem:[%s2] sm:$0xff]
        %v565 = vld [vmem:[#allocation2] sm:$0xff]
        %v566 = vld [vmem:[#allocation2 + $0x8] sm:$0xff]
        %v567 = vld [vmem:[#allocation2 + $0x10] sm:$0xff]
        %v568 = vld [vmem:[#allocation2 + $0x18] sm:$0xff]
        %v573 = vcombine.high %v565, %v565
        %v574 = vcombine.high %v566, %v566
        %v575 = vcombine.high %v567, %v567
        %v576 = vcombine.high %v568, %v568
        %vm577 = vcmask 31744
        %v579 = vsel %vm577, %v564, 0
        %vm581 = vcmask 1043456
        %v582 = vsel %vm581, %v565, 0
        %v584 = vsel %vm581, %v573, 0
        %v586 = vsel %vm581, %v566, 0
        %v588 = vsel %vm581, %v574, 0
        %v590 = vsel %vm581, %v567, 0
        %v592 = vsel %vm581, %v575, 0
        %v594 = vsel %vm581, %v568, 0
        %v596 = vsel %vm581, %v576, 0
        %598 = vmatprep.subr.mxu0 0.0
        %599 = vmatpush1.msra.mxu0 0.0
        %600 = vmatprep.subr.mxu0 0.0
        %601 = vmatpush1.msra.mxu0 0.0
        %602 = vmatprep.subr.mxu0 0.0
        %603 = vmatpush1.msra.mxu0 0.0
        %604 = vmatprep.subr.mxu0 0.0
        %605 = vmatpush1.msra.mxu0 0.0
        %606 = vmatprep.subr.mxu0 0.0
        %607 = vmatpush1.msra.mxu0 0.0
        %608 = vmatprep.subr.mxu0 0.0
        %609 = vmatpush1.msra.mxu0 0.0
        %610 = vmatprep.subr.mxu0 0.0
        %611 = vmatpush1.msra.mxu0 0.0
        %612 = vmatprep.subr.mxu0 0.0
        %613 = vmatpush1.msra.mxu0 0.0
        %614 = vmatprep.subr.mxu0 0.0
        %615 = vmatpush1.msra.mxu0 0.0
        %616 = vmatprep.subr.mxu0 0.0
        %617 = vmatpush1.msra.mxu0 0.0
        %618 = vmatprep.subr.mxu0 0.0
        %619 = vmatpush1.msra.mxu0 0.0
        %620 = vmatprep.subr.mxu0 0.0
        %621 = vmatpush1.msra.mxu0 0.0
        %622 = vmatprep.subr.mxu0 0.0
        %623 = vmatpush1.msra.mxu0 0.0
        %624 = vmatprep.subr.mxu0 0.0
        %625 = vmatpush1.msra.mxu0 0.0
        %626 = vmatprep.subr.mxu0 0.0
        %627 = vmatpush1.msra.mxu0 0.0
        %628 = vmatprep.subr.mxu0 %v584
        %629 = vmatpush1.msra.mxu0 %v582
        %630 = vmatprep.subr.mxu0 0.0
        %631 = vmatpush2.msra.mxu0 0.0
        %632 = vmatprep.subr.mxu0 0.0
        %633 = vmatpush2.msra.mxu0 0.0
        %634 = vmatprep.subr.mxu0 0.0
        %635 = vmatpush2.msra.mxu0 0.0
        %636 = vmatprep.subr.mxu0 0.0
        %637 = vmatpush2.msra.mxu0 0.0
        %638 = vmatprep.subr.mxu0 0.0
        %639 = vmatpush2.msra.mxu0 0.0
        %640 = vmatprep.subr.mxu0 0.0
        %641 = vmatpush2.msra.mxu0 0.0
        %642 = vmatprep.subr.mxu0 0.0
        %643 = vmatpush2.msra.mxu0 0.0
        %644 = vmatprep.subr.mxu0 0.0
        %645 = vmatpush2.msra.mxu0 0.0
        %646 = vmatprep.subr.mxu0 0.0
        %647 = vmatpush2.msra.mxu0 0.0
        %648 = vmatprep.subr.mxu0 0.0
        %649 = vmatpush2.msra.mxu0 0.0
        %650 = vmatprep.subr.mxu0 0.0
        %651 = vmatpush2.msra.mxu0 0.0
        %652 = vmatprep.subr.mxu0 0.0
        %653 = vmatpush2.msra.mxu0 0.0
        %654 = vmatprep.subr.mxu0 0.0
        %655 = vmatpush2.msra.mxu0 0.0
        %656 = vmatprep.subr.mxu0 0.0
        %657 = vmatpush2.msra.mxu0 0.0
        %658 = vmatprep.subr.mxu0 0.0
        %659 = vmatpush2.msra.mxu0 0.0
        %660 = vmatprep.subr.mxu0 0.0
        %661 = vmatpush2.msra.mxu0 0.0
        %662 = vmatprep.mubr.f32.mxu0 0.0
        %663 = vmatmul.mubr.f32.gmra.mxu0 %v579
        %v664 = vpop.f32.mrf.mxu0
        %v665 = vadd.f32 0.0, %v664
        %v666 = vpop.f32.mrf.mxu0
        %v667 = vadd.f32 0.0, %v666
        %668 = vdwg.mxu0
        %669 = vmatprep.subr.mxu0 0.0
        %670 = vmatpush1.msra.mxu0 0.0
        %671 = vmatprep.subr.mxu0 0.0
        %672 = vmatpush1.msra.mxu0 0.0
        %673 = vmatprep.subr.mxu0 0.0
        %674 = vmatpush1.msra.mxu0 0.0
        %675 = vmatprep.subr.mxu0 0.0
        %676 = vmatpush1.msra.mxu0 0.0
        %677 = vmatprep.subr.mxu0 0.0
        %678 = vmatpush1.msra.mxu0 0.0
        %679 = vmatprep.subr.mxu0 0.0
        %680 = vmatpush1.msra.mxu0 0.0
        %681 = vmatprep.subr.mxu0 0.0
        %682 = vmatpush1.msra.mxu0 0.0
        %683 = vmatprep.subr.mxu0 0.0
        %684 = vmatpush1.msra.mxu0 0.0
        %685 = vmatprep.subr.mxu0 0.0
        %686 = vmatpush1.msra.mxu0 0.0
        %687 = vmatprep.subr.mxu0 0.0
        %688 = vmatpush1.msra.mxu0 0.0
        %689 = vmatprep.subr.mxu0 0.0
        %690 = vmatpush1.msra.mxu0 0.0
        %691 = vmatprep.subr.mxu0 0.0
        %692 = vmatpush1.msra.mxu0 0.0
        %693 = vmatprep.subr.mxu0 0.0
        %694 = vmatpush1.msra.mxu0 0.0
        %695 = vmatprep.subr.mxu0 0.0
        %696 = vmatpush1.msra.mxu0 0.0
        %697 = vmatprep.subr.mxu0 0.0
        %698 = vmatpush1.msra.mxu0 0.0
        %699 = vmatprep.subr.mxu0 %v588
        %700 = vmatpush1.msra.mxu0 %v586
        %701 = vmatprep.subr.mxu0 0.0
        %702 = vmatpush2.msra.mxu0 0.0
        %703 = vmatprep.subr.mxu0 0.0
        %704 = vmatpush2.msra.mxu0 0.0
        %705 = vmatprep.subr.mxu0 0.0
        %706 = vmatpush2.msra.mxu0 0.0
        %707 = vmatprep.subr.mxu0 0.0
        %708 = vmatpush2.msra.mxu0 0.0
        %709 = vmatprep.subr.mxu0 0.0
        %710 = vmatpush2.msra.mxu0 0.0
        %711 = vmatprep.subr.mxu0 0.0
        %712 = vmatpush2.msra.mxu0 0.0
        %713 = vmatprep.subr.mxu0 0.0
        %714 = vmatpush2.msra.mxu0 0.0
        %715 = vmatprep.subr.mxu0 0.0
        %716 = vmatpush2.msra.mxu0 0.0
        %717 = vmatprep.subr.mxu0 0.0
        %718 = vmatpush2.msra.mxu0 0.0
        %719 = vmatprep.subr.mxu0 0.0
        %720 = vmatpush2.msra.mxu0 0.0
        %721 = vmatprep.subr.mxu0 0.0
        %722 = vmatpush2.msra.mxu0 0.0
        %723 = vmatprep.subr.mxu0 0.0
        %724 = vmatpush2.msra.mxu0 0.0
        %725 = vmatprep.subr.mxu0 0.0
        %726 = vmatpush2.msra.mxu0 0.0
        %727 = vmatprep.subr.mxu0 0.0
        %728 = vmatpush2.msra.mxu0 0.0
        %729 = vmatprep.subr.mxu0 0.0
        %730 = vmatpush2.msra.mxu0 0.0
        %731 = vmatprep.subr.mxu0 0.0
        %732 = vmatpush2.msra.mxu0 0.0
        %733 = vmatprep.mubr.f32.mxu0 0.0
        %734 = vmatmul.mubr.f32.gmra.mxu0 %v579
        %v735 = vpop.f32.mrf.mxu0
        %v736 = vadd.f32 0.0, %v735
        %v737 = vpop.f32.mrf.mxu0
        %v738 = vadd.f32 0.0, %v737
        %739 = vdwg.mxu0
        %740 = vmatprep.subr.mxu0 0.0
        %741 = vmatpush1.msra.mxu0 0.0
        %742 = vmatprep.subr.mxu0 0.0
        %743 = vmatpush1.msra.mxu0 0.0
        %744 = vmatprep.subr.mxu0 0.0
        %745 = vmatpush1.msra.mxu0 0.0
        %746 = vmatprep.subr.mxu0 0.0
        %747 = vmatpush1.msra.mxu0 0.0
        %748 = vmatprep.subr.mxu0 0.0
        %749 = vmatpush1.msra.mxu0 0.0
        %750 = vmatprep.subr.mxu0 0.0
        %751 = vmatpush1.msra.mxu0 0.0
        %752 = vmatprep.subr.mxu0 0.0
        %753 = vmatpush1.msra.mxu0 0.0
        %754 = vmatprep.subr.mxu0 0.0
        %755 = vmatpush1.msra.mxu0 0.0
        %756 = vmatprep.subr.mxu0 0.0
        %757 = vmatpush1.msra.mxu0 0.0
        %758 = vmatprep.subr.mxu0 0.0
        %759 = vmatpush1.msra.mxu0 0.0
        %760 = vmatprep.subr.mxu0 0.0
        %761 = vmatpush1.msra.mxu0 0.0
        %762 = vmatprep.subr.mxu0 0.0
        %763 = vmatpush1.msra.mxu0 0.0
        %764 = vmatprep.subr.mxu0 0.0
        %765 = vmatpush1.msra.mxu0 0.0
        %766 = vmatprep.subr.mxu0 0.0
        %767 = vmatpush1.msra.mxu0 0.0
        %768 = vmatprep.subr.mxu0 0.0
        %769 = vmatpush1.msra.mxu0 0.0
        %770 = vmatprep.subr.mxu0 %v592
        %771 = vmatpush1.msra.mxu0 %v590
        %772 = vmatprep.subr.mxu0 0.0
        %773 = vmatpush2.msra.mxu0 0.0
        %774 = vmatprep.subr.mxu0 0.0
        %775 = vmatpush2.msra.mxu0 0.0
        %776 = vmatprep.subr.mxu0 0.0
        %777 = vmatpush2.msra.mxu0 0.0
        %778 = vmatprep.subr.mxu0 0.0
        %779 = vmatpush2.msra.mxu0 0.0
        %780 = vmatprep.subr.mxu0 0.0
        %781 = vmatpush2.msra.mxu0 0.0
        %782 = vmatprep.subr.mxu0 0.0
        %783 = vmatpush2.msra.mxu0 0.0
        %784 = vmatprep.subr.mxu0 0.0
        %785 = vmatpush2.msra.mxu0 0.0
        %786 = vmatprep.subr.mxu0 0.0
        %787 = vmatpush2.msra.mxu0 0.0
        %788 = vmatprep.subr.mxu0 0.0
        %789 = vmatpush2.msra.mxu0 0.0
        %790 = vmatprep.subr.mxu0 0.0
        %791 = vmatpush2.msra.mxu0 0.0
        %792 = vmatprep.subr.mxu0 0.0
        %793 = vmatpush2.msra.mxu0 0.0
        %794 = vmatprep.subr.mxu0 0.0
        %795 = vmatpush2.msra.mxu0 0.0
        %796 = vmatprep.subr.mxu0 0.0
        %797 = vmatpush2.msra.mxu0 0.0
        %798 = vmatprep.subr.mxu0 0.0
        %799 = vmatpush2.msra.mxu0 0.0
        %800 = vmatprep.subr.mxu0 0.0
        %801 = vmatpush2.msra.mxu0 0.0
        %802 = vmatprep.subr.mxu0 0.0
        %803 = vmatpush2.msra.mxu0 0.0
        %804 = vmatprep.mubr.f32.mxu0 0.0
        %805 = vmatmul.mubr.f32.gmra.mxu0 %v579
        %v806 = vpop.f32.mrf.mxu0
        %v807 = vadd.f32 0.0, %v806
        %v808 = vpop.f32.mrf.mxu0
        %v809 = vadd.f32 0.0, %v808
        %810 = vdwg.mxu0
        %811 = vmatprep.subr.mxu0 0.0
        %812 = vmatpush1.msra.mxu0 0.0
        %813 = vmatprep.subr.mxu0 0.0
        %814 = vmatpush1.msra.mxu0 0.0
        %815 = vmatprep.subr.mxu0 0.0
        %816 = vmatpush1.msra.mxu0 0.0
        %817 = vmatprep.subr.mxu0 0.0
        %818 = vmatpush1.msra.mxu0 0.0
        %819 = vmatprep.subr.mxu0 0.0
        %820 = vmatpush1.msra.mxu0 0.0
        %821 = vmatprep.subr.mxu0 0.0
        %822 = vmatpush1.msra.mxu0 0.0
        %823 = vmatprep.subr.mxu0 0.0
        %824 = vmatpush1.msra.mxu0 0.0
        %825 = vmatprep.subr.mxu0 0.0
        %826 = vmatpush1.msra.mxu0 0.0
        %827 = vmatprep.subr.mxu0 0.0
        %828 = vmatpush1.msra.mxu0 0.0
        %829 = vmatprep.subr.mxu0 0.0
        %830 = vmatpush1.msra.mxu0 0.0
        %831 = vmatprep.subr.mxu0 0.0
        %832 = vmatpush1.msra.mxu0 0.0
        %833 = vmatprep.subr.mxu0 0.0
        %834 = vmatpush1.msra.mxu0 0.0
        %835 = vmatprep.subr.mxu0 0.0
        %836 = vmatpush1.msra.mxu0 0.0
        %837 = vmatprep.subr.mxu0 0.0
        %838 = vmatpush1.msra.mxu0 0.0
        %839 = vmatprep.subr.mxu0 0.0
        %840 = vmatpush1.msra.mxu0 0.0
        %841 = vmatprep.subr.mxu0 %v596
        %842 = vmatpush1.msra.mxu0 %v594
        %843 = vmatprep.subr.mxu0 0.0
        %844 = vmatpush2.msra.mxu0 0.0
        %845 = vmatprep.subr.mxu0 0.0
        %846 = vmatpush2.msra.mxu0 0.0
        %847 = vmatprep.subr.mxu0 0.0
        %848 = vmatpush2.msra.mxu0 0.0
        %849 = vmatprep.subr.mxu0 0.0
        %850 = vmatpush2.msra.mxu0 0.0
        %851 = vmatprep.subr.mxu0 0.0
        %852 = vmatpush2.msra.mxu0 0.0
        %853 = vmatprep.subr.mxu0 0.0
        %854 = vmatpush2.msra.mxu0 0.0
        %855 = vmatprep.subr.mxu0 0.0
        %856 = vmatpush2.msra.mxu0 0.0
        %857 = vmatprep.subr.mxu0 0.0
        %858 = vmatpush2.msra.mxu0 0.0
        %859 = vmatprep.subr.mxu0 0.0
        %860 = vmatpush2.msra.mxu0 0.0
        %861 = vmatprep.subr.mxu0 0.0
        %862 = vmatpush2.msra.mxu0 0.0
        %863 = vmatprep.subr.mxu0 0.0
        %864 = vmatpush2.msra.mxu0 0.0
        %865 = vmatprep.subr.mxu0 0.0
        %866 = vmatpush2.msra.mxu0 0.0
        %867 = vmatprep.subr.mxu0 0.0
        %868 = vmatpush2.msra.mxu0 0.0
        %869 = vmatprep.subr.mxu0 0.0
        %870 = vmatpush2.msra.mxu0 0.0
        %871 = vmatprep.subr.mxu0 0.0
        %872 = vmatpush2.msra.mxu0 0.0
        %873 = vmatprep.subr.mxu0 0.0
        %874 = vmatpush2.msra.mxu0 0.0
        %875 = vmatprep.mubr.f32.mxu0 0.0
        %876 = vmatmul.mubr.f32.gmra.mxu0 %v579
        %v877 = vpop.f32.mrf.mxu0
        %v878 = vadd.f32 0.0, %v877
        %v879 = vpop.f32.mrf.mxu0
        %v880 = vadd.f32 0.0, %v879
        %881 = vdwg.mxu0
        %v882 = vpack.c.bf16 %v665, %v665
        %883 = vst [vmem:[%s401] sm:$0xf] %v882
        %v884 = vpack.c.bf16 %v667, %v667
        %s885 = scalar_lea.vmem %s401, 4 [#allocation13]
        %886 = vst [vmem:[%s885] sm:$0xf] %v884
        %v887 = vpack.c.bf16 %v736, %v736
        %s888 = scalar_lea.vmem %s401, 8 [#allocation13]
        %889 = vst [vmem:[%s888] sm:$0xf] %v887
        %v890 = vpack.c.bf16 %v738, %v738
        %s891 = scalar_lea.vmem %s401, 12 [#allocation13]
        %892 = vst [vmem:[%s891] sm:$0xf] %v890
        %v893 = vpack.c.bf16 %v807, %v807
        %s894 = scalar_lea.vmem %s401, 16 [#allocation13]
        %895 = vst [vmem:[%s894] sm:$0xf] %v893
        %v896 = vpack.c.bf16 %v809, %v809
        %s897 = scalar_lea.vmem %s401, 20 [#allocation13]
        %898 = vst [vmem:[%s897] sm:$0xf] %v896
        %v899 = vpack.c.bf16 %v878, %v878
        %s900 = scalar_lea.vmem %s401, 24 [#allocation13]
        %901 = vst [vmem:[%s900] sm:$0xf] %v899
        %v902 = vpack.c.bf16 %v880, %v880
        %s903 = scalar_lea.vmem %s401, 28 [#allocation13]
        %904 = vst [vmem:[%s903] sm:$0xf] %v902
        %v905 = vld [vmem:[%s401] sm:$0xf]
        %v906 = vld [vmem:[%s401 + $0x4] sm:$0xf]
        %v907 = vld [vmem:[%s401 + $0x8] sm:$0xf]
        %v908 = vld [vmem:[%s401 + $0xc] sm:$0xf]
        %v909 = vld [vmem:[%s401 + $0x10] sm:$0xf]
        %v910 = vld [vmem:[%s401 + $0x14] sm:$0xf]
        %v911 = vld [vmem:[%s401 + $0x18] sm:$0xf]
        %v912 = vld [vmem:[%s401 + $0x1c] sm:$0xf]
        %v913 = vld [vmem:[%s363] sm:$0xff]
        %v914 = vld [vmem:[%s363 + $0x8] sm:$0xff]
        %v915 = vld [vmem:[%s363 + $0x10] sm:$0xff]
        %v916 = vld [vmem:[%s363 + $0x18] sm:$0xff]
        %v917 = vld [vmem:[%s363 + $0x20] sm:$0xff]
        %v918 = vld [vmem:[%s363 + $0x28] sm:$0xff]
        %v919 = vld [vmem:[%s363 + $0x30] sm:$0xff]
        %v920 = vld [vmem:[%s363 + $0x38] sm:$0xff]
        %v921 = vpack.c.bf16 %v914, %v913
        %v922 = vpack.c.bf16 %v916, %v915
        %v923 = vpack.c.bf16 %v918, %v917
        %v924 = vpack.c.bf16 %v920, %v919
        %v933 = vunpack.c.l.b16 %v905
        %v934 = vunpack.c.l.b16 %v906
        %v935 = vunpack.c.l.b16 %v907
        %v936 = vunpack.c.l.b16 %v908
        %v937 = vunpack.c.l.b16 %v909
        %v938 = vunpack.c.l.b16 %v910
        %v939 = vunpack.c.l.b16 %v911
        %v940 = vunpack.c.l.b16 %v912
        %v941 = vpack.c.b16 %v934, %v933
        %v942 = vpack.c.b16 %v936, %v935
        %v943 = vpack.c.b16 %v938, %v937
        %v944 = vpack.c.b16 %v940, %v939
        %v949 = vld [vmem:[#allocation12] sm:$0xf]
        %v950 = vld [vmem:[#allocation12 + $0x4] sm:$0xf]
        %v951 = vld [vmem:[#allocation12 + $0x8] sm:$0xf]
        %v952 = vld [vmem:[#allocation12 + $0xc] sm:$0xf]
        %v953 = vld [vmem:[#allocation12 + $0x10] sm:$0xf]
        %v954 = vld [vmem:[#allocation12 + $0x14] sm:$0xf]
        %v955 = vld [vmem:[#allocation12 + $0x18] sm:$0xf]
        %v956 = vld [vmem:[#allocation12 + $0x1c] sm:$0xf]
        %v957 = vld [vmem:[#allocation12 + $0x20] sm:$0xf]
        %v958 = vld [vmem:[#allocation12 + $0x24] sm:$0xf]
        %v959 = vld [vmem:[#allocation12 + $0x28] sm:$0xf]
        %v960 = vld [vmem:[#allocation12 + $0x2c] sm:$0xf]
        %v961 = vld [vmem:[#allocation12 + $0x30] sm:$0xf]
        %v962 = vld [vmem:[#allocation12 + $0x34] sm:$0xf]
        %v963 = vld [vmem:[#allocation12 + $0x38] sm:$0xf]
        %v964 = vld [vmem:[#allocation12 + $0x3c] sm:$0xf]
        %v965 = vld [vmem:[#allocation12 + $0x40] sm:$0xf]
        %v966 = vld [vmem:[#allocation12 + $0x44] sm:$0xf]
        %v967 = vld [vmem:[#allocation12 + $0x48] sm:$0xf]
        %v968 = vld [vmem:[#allocation12 + $0x4c] sm:$0xf]
        %v969 = vld [vmem:[#allocation12 + $0x50] sm:$0xf]
        %v970 = vld [vmem:[#allocation12 + $0x54] sm:$0xf]
        %v971 = vld [vmem:[#allocation12 + $0x58] sm:$0xf]
        %v972 = vld [vmem:[#allocation12 + $0x5c] sm:$0xf]
        %v973 = vld [vmem:[#allocation12 + $0x60] sm:$0xf]
        %v974 = vld [vmem:[#allocation12 + $0x64] sm:$0xf]
        %v975 = vld [vmem:[#allocation12 + $0x68] sm:$0xf]
        %v976 = vld [vmem:[#allocation12 + $0x6c] sm:$0xf]
        %v977 = vld [vmem:[#allocation12 + $0x70] sm:$0xf]
        %v978 = vld [vmem:[#allocation12 + $0x74] sm:$0xf]
        %v979 = vld [vmem:[#allocation12 + $0x78] sm:$0xf]
        %v980 = vld [vmem:[#allocation12 + $0x7c] sm:$0xf]
        %v1013 = vunpack.c.l.b16 %v949
        %v1014 = vunpack.c.l.b16 %v950
        %v1015 = vunpack.c.l.b16 %v951
        %v1016 = vunpack.c.l.b16 %v952
        %v1017 = vunpack.c.l.b16 %v953
        %v1018 = vunpack.c.l.b16 %v954
        %v1019 = vunpack.c.l.b16 %v955
        %v1020 = vunpack.c.l.b16 %v956
        %v1021 = vunpack.c.l.b16 %v957
        %v1022 = vunpack.c.l.b16 %v958
        %v1023 = vunpack.c.l.b16 %v959
        %v1024 = vunpack.c.l.b16 %v960
        %v1025 = vunpack.c.l.b16 %v961
        %v1026 = vunpack.c.l.b16 %v962
        %v1027 = vunpack.c.l.b16 %v963
        %v1028 = vunpack.c.l.b16 %v964
        %v1029 = vunpack.c.l.b16 %v965
        %v1030 = vunpack.c.l.b16 %v966
        %v1031 = vunpack.c.l.b16 %v967
        %v1032 = vunpack.c.l.b16 %v968
        %v1033 = vunpack.c.l.b16 %v969
        %v1034 = vunpack.c.l.b16 %v970
        %v1035 = vunpack.c.l.b16 %v971
        %v1036 = vunpack.c.l.b16 %v972
        %v1037 = vunpack.c.l.b16 %v973
        %v1038 = vunpack.c.l.b16 %v974
        %v1039 = vunpack.c.l.b16 %v975
        %v1040 = vunpack.c.l.b16 %v976
        %v1041 = vunpack.c.l.b16 %v977
        %v1042 = vunpack.c.l.b16 %v978
        %v1043 = vunpack.c.l.b16 %v979
        %v1044 = vunpack.c.l.b16 %v980
        %v1045 = vpack.c.b16 %v1014, %v1013
        %v1046 = vpack.c.b16 %v1016, %v1015
        %v1047 = vpack.c.b16 %v1018, %v1017
        %v1048 = vpack.c.b16 %v1020, %v1019
        %v1049 = vpack.c.b16 %v1022, %v1021
        %v1050 = vpack.c.b16 %v1024, %v1023
        %v1051 = vpack.c.b16 %v1026, %v1025
        %v1052 = vpack.c.b16 %v1028, %v1027
        %v1053 = vpack.c.b16 %v1030, %v1029
        %v1054 = vpack.c.b16 %v1032, %v1031
        %v1055 = vpack.c.b16 %v1034, %v1033
        %v1056 = vpack.c.b16 %v1036, %v1035
        %v1057 = vpack.c.b16 %v1038, %v1037
        %v1058 = vpack.c.b16 %v1040, %v1039
        %v1059 = vpack.c.b16 %v1042, %v1041
        %v1060 = vpack.c.b16 %v1044, %v1043
        %1077 = vmatprep.subr.bf16.mxu0 0
        %1078 = vmatpush1.bf16.msra.mxu0 %v1052
        %1079 = vmatprep.subr.bf16.mxu0 0
        %1080 = vmatpush1.bf16.msra.mxu0 %v1051
        %1081 = vmatprep.subr.bf16.mxu0 0
        %1082 = vmatpush1.bf16.msra.mxu0 %v1050
        %1083 = vmatprep.subr.bf16.mxu0 0
        %1084 = vmatpush1.bf16.msra.mxu0 %v1049
        %1085 = vmatprep.subr.bf16.mxu0 0
        %1086 = vmatpush1.bf16.msra.mxu0 %v1048
        %1087 = vmatprep.subr.bf16.mxu0 0
        %1088 = vmatpush1.bf16.msra.mxu0 %v1047
        %1089 = vmatprep.subr.bf16.mxu0 0
        %1090 = vmatpush1.bf16.msra.mxu0 %v1046
        %1091 = vmatprep.subr.bf16.mxu0 0
        %1092 = vmatpush1.bf16.msra.mxu0 %v1045
        %1093 = vmatprep.subr.bf16.mxu0 0
        %1094 = vmatpush2.bf16.msra.mxu0 %v1060
        %1095 = vmatprep.subr.bf16.mxu0 0
        %1096 = vmatpush2.bf16.msra.mxu0 %v1059
        %1097 = vmatprep.subr.bf16.mxu0 0
        %1098 = vmatpush2.bf16.msra.mxu0 %v1058
        %1099 = vmatprep.subr.bf16.mxu0 0
        %1100 = vmatpush2.bf16.msra.mxu0 %v1057
        %1101 = vmatprep.subr.bf16.mxu0 0
        %1102 = vmatpush2.bf16.msra.mxu0 %v1056
        %1103 = vmatprep.subr.bf16.mxu0 0
        %1104 = vmatpush2.bf16.msra.mxu0 %v1055
        %1105 = vmatprep.subr.bf16.mxu0 0
        %1106 = vmatpush2.bf16.msra.mxu0 %v1054
        %1107 = vmatprep.subr.bf16.mxu0 0
        %1108 = vmatpush2.bf16.msra.mxu0 %v1053
        %1109 = vmatprep.mubr.bf16.mxu0 %v921
        %1110 = vmatmul.mubr.bf16.gmra.mxu0 %v941
        %v1111 = vpop.f32.mrf.mxu0
        %v1112 = vadd.f32 0.0, %v1111
        %v1113 = vpop.f32.mrf.mxu0
        %v1114 = vpop.f32.mrf.mxu0
        %v1115 = vadd.f32 0.0, %v1114
        %v1116 = vpop.f32.mrf.mxu0
        %1117 = vmatprep.mubr.bf16.mxu0 %v922
        %1118 = vmatmul.mubr.bf16.gmra.mxu0 %v942
        %v1119 = vpop.f32.mrf.mxu0
        %v1120 = vadd.f32 0.0, %v1119
        %v1121 = vpop.f32.mrf.mxu0
        %v1122 = vpop.f32.mrf.mxu0
        %v1123 = vadd.f32 0.0, %v1122
        %v1124 = vpop.f32.mrf.mxu0
        %1125 = vmatprep.mubr.bf16.mxu0 %v923
        %1126 = vmatmul.mubr.bf16.gmra.mxu0 %v943
        %v1127 = vpop.f32.mrf.mxu0
        %v1128 = vadd.f32 0.0, %v1127
        %v1129 = vpop.f32.mrf.mxu0
        %v1130 = vpop.f32.mrf.mxu0
        %v1131 = vadd.f32 0.0, %v1130
        %v1132 = vpop.f32.mrf.mxu0
        %1133 = vmatprep.mubr.bf16.mxu0 %v924
        %1134 = vmatmul.mubr.bf16.gmra.mxu0 %v944
        %v1135 = vpop.f32.mrf.mxu0
        %v1136 = vadd.f32 0.0, %v1135
        %v1137 = vpop.f32.mrf.mxu0
        %v1138 = vpop.f32.mrf.mxu0
        %v1139 = vadd.f32 0.0, %v1138
        %v1140 = vpop.f32.mrf.mxu0
        %1141 = vdwg.mxu0
        %v1142 = vadd.f32 %v1112, %v1115
        %v1143 = vadd.f32 %v1142, %v1120
        %v1144 = vadd.f32 %v1143, %v1123
        %v1145 = vadd.f32 %v1144, %v1128
        %v1146 = vadd.f32 %v1145, %v1131
        %v1147 = vadd.f32 %v1146, %v1136
        %v1148 = vadd.f32 %v1147, %v1139
        %v1149 = vrot.slane %v1148, 4
        %v1150 = vadd.f32 %v1148, %v1149
        %v1151 = vrot.slane %v1150, 2
        %v1152 = vadd.f32 %v1150, %v1151
        %v1153 = vrot.slane %v1152, 1
        %v1154 = vadd.f32 %v1152, %v1153
        %v1155 = vmul.f32 %v1112, %v1112
        %v1156 = vmul.f32 %v1115, %v1115
        %v1157 = vmul.f32 %v1120, %v1120
        %v1158 = vmul.f32 %v1123, %v1123
        %v1159 = vmul.f32 %v1128, %v1128
        %v1160 = vmul.f32 %v1131, %v1131
        %v1161 = vmul.f32 %v1136, %v1136
        %v1162 = vmul.f32 %v1139, %v1139
        %v1163 = vadd.f32 %v1155, %v1156
        %v1164 = vadd.f32 %v1163, %v1157
        %v1165 = vadd.f32 %v1164, %v1158
        %v1166 = vadd.f32 %v1165, %v1159
        %v1167 = vadd.f32 %v1166, %v1160
        %v1168 = vadd.f32 %v1167, %v1161
        %v1169 = vadd.f32 %v1168, %v1162
        %v1170 = vrot.slane %v1169, 4
        %v1171 = vadd.f32 %v1169, %v1170
        %v1172 = vrot.slane %v1171, 2
        %v1173 = vadd.f32 %v1171, %v1172
        %v1174 = vrot.slane %v1173, 1
        %v1175 = vadd.f32 %v1173, %v1174
        %vm1176 = vcmask 1040384
        %v1177 = vsel %vm1176, %v1154, %v1175
        %1178 = vst [vmem:[%s408] sm:$0x3] %v1177
        %s1179 = sand.u32 %s193, 1
        %s1180 = scalar_lea.sflag [#allocation5], %s1179
        %s1181 = sand.u32 %s193, 1
        %s1182 = smul.addr %s1181, 32
        %s1183 = scalar_lea.vmem [#allocation13], %s1182
        %s1184 = sand.u32 %s221, 1
        %s1185 = scalar_lea.sflag [#allocation15], %s1184
        %s1186 = sand.u32 %s221, 1
        %s1187 = smul.addr %s1186, 2
        %s1188 = scalar_lea.vmem [#allocation14], %s1187
        // Predicated region
        $region65: #{tpu_custom_call.1} parent=43 // pred_check
          %p1189 = pneg %p203
        $region66: #{tpu_custom_call.1} parent=43 // pred_check_branch
          %1191 = sbr.rel (%p1189) target = $region68
        $region67: #{tpu_custom_call.1} parent=43 // pred_region
          %s1192 = smul.u32 8, %s38
          %s1194 = ssub.s32 512, 512
          %1195 = vsyncadd %s1180, %s1194
          %s1196 = smul.addr %s37, 8
          %s1197 = sadd.s32 %s1192, %s1196
          %s1198 = smul.addr %s1197, 64
          %s1199 = scalar_lea.hbm %s6, %s1198
          %s1200 = sshll.u32 %s1183, 4
          %s1201 = int_to_ptr.vmem [resolvable:$true] %s1200
          %1206 = dma.vmem_to_hbm [thread:$0]  %s1201, 512, %s1199, %s1180, 64, 64, 4
        $region68: #{tpu_custom_call.1} parent=43 // pred_fallthru
          _
        // Predicated region
        $region69: #{tpu_custom_call.1} parent=43 // pred_check
          %p1207 = pneg %p231
        $region70: #{tpu_custom_call.1} parent=43 // pred_check_branch
          %1209 = sbr.rel (%p1207) target = $region72
        $region71: #{tpu_custom_call.1} parent=43 // pred_region
          %s1211 = ssub.s32 32, 32
          %1212 = vsyncadd %s1185, %s1211
          %s1213 = sadd.s32 %s38, %s37
          %s1214 = smul.addr %s1213, 32
          %s1215 = scalar_lea.hbm %s7, %s1214
          %s1217 = sshll.u32 %s1188, 4
          %s1218 = int_to_ptr.vmem [resolvable:$true] %s1217
          %1220 = dma.vmem_to_hbm [thread:$0]  %s1218, 32, %s1215, %s1185
        $region72: #{tpu_custom_call.1} parent=43 // pred_fallthru
          _
      $region44: #{tpu_custom_call.1} parent=5 // pred_fallthru
        _
      %p1221 = scmp.le.s32.totalorder 2, %s28
      // Predicated region
      $region73: #{tpu_custom_call.1} parent=5 // pred_check
        %p1222 = pneg %p1221
      $region74: #{tpu_custom_call.1} parent=5 // pred_check_branch
        %1224 = sbr.rel (%p1222) target = $region76
      $region75: #{tpu_custom_call.1} parent=5 // pred_region
        %s1225 = ssub.s32 %s28, 2
        // Predicated region
        $region77: #{tpu_custom_call.1} parent=75 // pred_check
          %p1226 = pneg %p209
        $region78: #{tpu_custom_call.1} parent=75 // pred_check_branch
          %1228 = sbr.rel (%p1226) target = $region80
        $region79: #{tpu_custom_call.1} parent=75 // pred_region
          %s1229 = sand.u32 %s194, 1
          %s1230 = scalar_lea.sflag [#allocation5], %s1229
          %s1231 = sand.u32 %s194, 1
          %s1232 = smul.addr %s1231, 32
          %s1233 = scalar_lea.vmem [#allocation13], %s1232
          %1234 = dma.done %s1230, 512
        $region80: #{tpu_custom_call.1} parent=75 // pred_fallthru
          _
        // Predicated region
        $region81: #{tpu_custom_call.1} parent=75 // pred_check
          %p1235 = pneg %p237
        $region82: #{tpu_custom_call.1} parent=75 // pred_check_branch
          %1237 = sbr.rel (%p1235) target = $region84
        $region83: #{tpu_custom_call.1} parent=75 // pred_region
          %s1238 = sand.u32 %s222, 1
          %s1239 = scalar_lea.sflag [#allocation15], %s1238
          %s1240 = sand.u32 %s222, 1
          %s1241 = smul.addr %s1240, 2
          %s1242 = scalar_lea.vmem [#allocation14], %s1241
          %1243 = dma.done %s1239, 32
        $region84: #{tpu_custom_call.1} parent=75 // pred_fallthru
          _
      $region76: #{tpu_custom_call.1} parent=5 // pred_fallthru
        _
    $region6: #{tpu_custom_call.1} parent=1 // loop_footer
      %s32 = sadd.s32 1, %s28
    $region7: #{tpu_custom_call.1} parent=1 // loop_footer_branch
      %27 = sbr.rel target = $region3
    $region8: #{tpu_custom_call.1} parent=1 // loop_exit
      _
    %1244 = vsyncpa [#allocation4], 1
    %s1245 = scalar_lea.sflag [#allocation4], 1
    %1246 = vsyncpa %s1245, 1
    %1247 = vsyncpa [#allocation11], 1
    %s1248 = scalar_lea.sflag [#allocation11], 1
    %1249 = vsyncpa %s1248, 1
    %1250 = vsyncpa [#allocation5], 1
    %s1251 = scalar_lea.sflag [#allocation5], 1
    %1252 = vsyncpa %s1251, 1
    %1253 = vsyncpa [#allocation15], 1
    %s1254 = scalar_lea.sflag [#allocation15], 1
    %1255 = vsyncpa %s1254, 1
    %1256 = vsyncpa [#allocation6], 1
    %s1257 = scalar_lea.sflag [#allocation6], 1
    %1258 = vsyncpa %s1257, 1
    %1259 = vsyncpa [#allocation8], 1

</llo_original>
